<compile_context>
chip_gen: v7x
topology: tpu7x:2x2x1
jax: 0.10.0
libtpu: 0.0.40
codegen_flags: <defaults>
</compile_context>

<pallas_src>
import functools

import jax
import jax.numpy as jnp
from jax.experimental import pallas as pl
from jax.experimental.pallas import tpu as pltpu


def _time2vec_kernel(t_ref, w_ref, mask_ref, o_ref):
    # t_ref    : (TM, K+1)   K packed time values + a trailing 1.0 per row
    # w_ref    : (K+1, K*D)  rows 0..K-1: block-diagonal [w0, W]; row K: tiled [b0, B]
    # mask_ref : (1, K*D)    1.0 on linear columns (col % D == 0), else 0.0
    # o_ref    : (TM, K*D)
    lin = jnp.dot(t_ref[...], w_ref[...],
                  preferred_element_type=jnp.float32,
                  precision=jax.lax.Precision.HIGHEST)
    o_ref[...] = jnp.where(mask_ref[...] > 0.5, lin, jnp.sin(lin)).astype(o_ref.dtype)


def _pick_packing(d_model, n):
    """Packing factor K: K time steps share one K*D-lane output row."""
    if d_model % 128 == 0 or 128 % d_model != 0:
        return 1                       # already lane-dense, or awkward D: no packing
    k_min = 128 // d_model             # smallest K giving 128-multiple rows
    k = k_min
    while 2 * k * d_model <= 1024:     # widen output rows to 256..1024 lanes
        k *= 2
    kk = k
    while kk > k_min and n % kk != 0:  # prefer K | n -> no post-kernel slice copy
        kk //= 2
    return kk if n % kk == 0 else k


@functools.partial(jax.jit, static_argnames=("tile_m", "out_dtype"))
def time2vec(t, w0, b0, W, B, *, tile_m=2048, out_dtype=jnp.float32):
    """t: float array of shape (B, S) (or any shape). Returns (..., d_model)."""
    d_model = W.shape[0] + 1
    orig_shape = t.shape
    t_flat = t.reshape(-1).astype(jnp.float32)
    n = t_flat.shape[0]

    k = _pick_packing(d_model, n)
    kd = k * d_model
    n_grp = pl.cdiv(n, k)                     # packed output rows actually needed
    out_itemsize = jnp.dtype(out_dtype).itemsize

    # --- Row-tile sizing ------------------------------------------------------
    # >= ~1 MiB of output per grid step (grid-step-overhead floor) and >= 4 grid
    # steps when there is enough work (v7x: 2 TCs x >= 2 pipelined steps each).
    min_rows = max(128, (1 << 20) // (kd * out_itemsize))
    min_rows = pl.cdiv(min_rows, 16) * 16
    tm = int(tile_m)
    if n_grp >= 4 * min_rows:
        tm = min(tm, max(min_rows, pl.cdiv(n_grp, 4)))
    else:
        tm = min(tm, n_grp)
    tm = max(16, pl.cdiv(tm, 16) * 16)

    # Cap per-step VMEM footprint (~28 MiB): safe for v7x's smaller VMEM.
    t_cols = pl.cdiv(k + 1, 128) * 128        # lane padding of the t block

    def vmem_bytes(tm_):
        return (2 * tm_ * t_cols * 4           # double-buffered t block
                + 2 * tm_ * kd * out_itemsize  # double-buffered output block
                + (k + 2) * kd * 4)            # resident weight block + mask

    while tm > 16 and vmem_bytes(tm) > (28 << 20):
        tm = max(16, pl.cdiv(pl.cdiv(tm, 2), 16) * 16)

    grid_m = pl.cdiv(n_grp, tm)
    n_grp_pad = grid_m * tm                   # pad t so input blocks are never ragged
    n_pad = n_grp_pad * k
    if n_pad != n:
        t_flat = jnp.pad(t_flat, (0, n_pad - n))

    # Packed t rows + a ones column so the bias add rides the MXU accumulate.
    t_aug = jnp.concatenate(
        [t_flat.reshape(n_grp_pad, k), jnp.ones((n_grp_pad, 1), jnp.float32)],
        axis=1)                                                         # (n_grp_pad, K+1)

    w_full = jnp.concatenate([w0, W]).astype(jnp.float32)               # (D,)
    b_full = jnp.concatenate([b0, B]).astype(jnp.float32)               # (D,)
    w_blk = jnp.kron(jnp.eye(k, dtype=jnp.float32), w_full[None, :])    # (K, K*D)
    w_aug = jnp.concatenate([w_blk, jnp.tile(b_full, k)[None, :]], 0)   # (K+1, K*D)
    lin_mask = ((jnp.arange(kd) % d_model) == 0).astype(jnp.float32)[None, :]

    vmem_limit = int(min(max(vmem_bytes(tm) + (2 << 20), 8 << 20), 32 << 20))

    out = pl.pallas_call(
        _time2vec_kernel,
        # Unpadded packed-row count: the ragged final block's out-of-bounds
        # writes are dropped, avoiding a post-kernel slice copy when K | n.
        out_shape=jax.ShapeDtypeStruct((n_grp, kd), out_dtype),
        grid_spec=pltpu.PrefetchScalarGridSpec(
            num_scalar_prefetch=0,
            grid=(grid_m,),
            in_specs=[
                pl.BlockSpec((tm, k + 1), lambda i: (i, 0)),   # packed t rows
                pl.BlockSpec((k + 1, kd), lambda i: (0, 0)),   # resident weight block
                pl.BlockSpec((1, kd), lambda i: (0, 0)),       # resident linear mask
            ],
            out_specs=pl.BlockSpec((tm, kd), lambda i: (i, 0)),
        ),
        compiler_params=pltpu.CompilerParams(
            dimension_semantics=("parallel",),
            vmem_limit_bytes=vmem_limit),
    )(t_aug, w_aug, lin_mask)

    # Free row-major un-packing: (n_grp, K*D) -> (n_grp*K, D).  The [:n] slice
    # (and its copy) only triggers when K does not divide B*S.
    out = out.reshape(n_grp * k, d_model)
    if n_grp * k != n:
        out = out[:n]
    return out.reshape(*orig_shape, d_model)


def time2vec_ref(t, w0, b0, W, B):
    t = t[..., None]
    v1 = w0 * t + b0
    v2 = jnp.sin(t * W + B)
    return jnp.concatenate([v1, v2], axis=-1)


if __name__ == "__main__":
    d_model = 32
    batch, seq = 2, 8

    key = jax.random.PRNGKey(0)
    k_t, k_w0, k_b0, k_W, k_B = jax.random.split(key, 5)

    # The module initializes its parameters to zeros; small random values
    # exercise the kernel math non-trivially.
    t = jax.random.uniform(k_t, (batch, seq), jnp.float32, 0.0, 10.0)
    w0 = jax.random.normal(k_w0, (1,), jnp.float32) * 0.1
    b0 = jax.random.normal(k_b0, (1,), jnp.float32) * 0.1
    W = jax.random.normal(k_W, (d_model - 1,), jnp.float32) * 0.1
    B = jax.random.normal(k_B, (d_model - 1,), jnp.float32) * 0.1

    out = jax.block_until_ready(time2vec(t, w0, b0, W, B))
    ref = time2vec_ref(t, w0, b0, W, B)
    assert out.shape == (batch, seq, d_model), out.shape
    assert jnp.allclose(out, ref, atol=1e-5, rtol=1e-5), (
        float(jnp.max(jnp.abs(out - ref))))

    # Also exercise the non-divisible / ragged-final-block path.
    t2 = jax.random.uniform(k_t, (batch, 7), jnp.float32, 0.0, 10.0)
    out2 = jax.block_until_ready(time2vec(t2, w0, b0, W, B))
    ref2 = time2vec_ref(t2, w0, b0, W, B)
    assert out2.shape == (batch, 7, d_model), out2.shape
    assert jnp.allclose(out2, ref2, atol=1e-5, rtol=1e-5), (
        float(jnp.max(jnp.abs(out2 - ref2))))

    print("KERNEL_OK")
</pallas_src>

<mosaic_0001>
module attributes {stable_mosaic.version = 11 : i64} {
  func.func @_time2vec_kernel(%arg0: i32, %arg1: memref<16x17xf32, #tpu.memory_space<vmem>>, %arg2: memref<17x512xf32, #tpu.memory_space<vmem>>, %arg3: memref<1x512xf32, #tpu.memory_space<vmem>>, %arg4: memref<16x512xf32, #tpu.memory_space<vmem>>) attributes {dimension_semantics = [#tpu.dimension_semantics<parallel>], iteration_bounds = array<i64: 1>, scalar_prefetch = 0 : i64, scratch_operands = 0 : i64, tpu.core_type = #tpu.core_type<tc>, window_params = [{transform_indices = @transform_0, window_bounds = array<i64: 16, 17>}, {pipeline_mode = #tpu.pipeline_mode<synchronous>, transform_indices = @transform_1, window_bounds = array<i64: 17, 512>}, {pipeline_mode = #tpu.pipeline_mode<synchronous>, transform_indices = @transform_2, window_bounds = array<i64: 1, 512>}, {transform_indices = @transform_3, window_bounds = array<i64: 16, 512>}]} {
    %c0 = arith.constant 0 : index
    %c0_0 = arith.constant 0 : index
    %0 = vector.load %arg1[%c0, %c0_0] : memref<16x17xf32, #tpu.memory_space<vmem>>, vector<16x17xf32>
    %c0_1 = arith.constant 0 : index
    %c0_2 = arith.constant 0 : index
    %1 = vector.load %arg2[%c0_1, %c0_2] : memref<17x512xf32, #tpu.memory_space<vmem>>, vector<17x512xf32>
    %cst = arith.constant dense<0.000000e+00> : vector<16x512xf32>
    %2 = tpu.matmul %0, %1, %cst {dimension_numbers = #tpu.dot_dimension_numbers<[1], [0], [0], [1], [0, 0, 1, 1], [], []>, precision = #tpu.contract_precision<fp32>} : vector<16x17xf32>, vector<17x512xf32>, vector<16x512xf32> -> vector<16x512xf32>
    %c0_3 = arith.constant 0 : index
    %c0_4 = arith.constant 0 : index
    %3 = vector.load %arg3[%c0_3, %c0_4] : memref<1x512xf32, #tpu.memory_space<vmem>>, vector<1x512xf32>
    %cst_5 = arith.constant 5.000000e-01 : f32
    %4 = vector.broadcast %cst_5 : f32 to vector<1x512xf32>
    %5 = arith.cmpf ogt, %3, %4 : vector<1x512xf32>
    %6 = math.sin %2 : vector<16x512xf32>
    %7 = vector.shape_cast %5 : vector<1x512xi1> to vector<1x512xi1>
    %8 = vector.broadcast %7 : vector<1x512xi1> to vector<16x512xi1>
    %9 = arith.select %8, %2, %6 : vector<16x512xi1>, vector<16x512xf32>
    %c0_6 = arith.constant 0 : index
    %c0_7 = arith.constant 0 : index
    %10 = vector.load %arg4[%c0_6, %c0_7] : memref<16x512xf32, #tpu.memory_space<vmem>>, vector<16x512xf32>
    tpu.vector_store %arg4[%c0_6, %c0_7], %9 {strides = array<i32>} : memref<16x512xf32, #tpu.memory_space<vmem>>, vector<16x512xf32>,
    return
  }
  func.func @transform_0(%arg0: i32) -> (i32, i32) {
    %c0_i32 = arith.constant 0 : i32
    %c0_i32_0 = arith.constant 0 : i32
    return %arg0, %c0_i32 : i32, i32
  }
  func.func @transform_1(%arg0: i32) -> (i32, i32) {
    %c0_i32 = arith.constant 0 : i32
    %c0_i32_0 = arith.constant 0 : i32
    %c0_i32_1 = arith.constant 0 : i32
    return %c0_i32, %c0_i32_0 : i32, i32
  }
  func.func @transform_2(%arg0: i32) -> (i32, i32) {
    %c0_i32 = arith.constant 0 : i32
    %c0_i32_0 = arith.constant 0 : i32
    %c0_i32_1 = arith.constant 0 : i32
    return %c0_i32, %c0_i32_0 : i32, i32
  }
  func.func @transform_3(%arg0: i32) -> (i32, i32) {
    %c0_i32 = arith.constant 0 : i32
    %c0_i32_0 = arith.constant 0 : i32
    return %arg0, %c0_i32 : i32, i32
  }
}

</mosaic_0001>

<llo_original>
// kernel: tile.9
$region0: #{tile.9}
  %s0 = inlined_call_operand.vmem [shape: f32[16,32], index: 0, kind: input, shape index: {}]
  %s1 = inlined_call_operand.vmem [shape: f32[1,512], index: 1, kind: output, shape index: {}]
  $region1: #{tile.9} parent=0
    #allocation0 [shape = 'u8[16384]{0}', space=vmem, size = 0x4000, scoped, tag = 'scoped mem for output reshape']
    %v2 = vld [vmem:[%s0] ss:$4 sm:$0xf]
    %vm3 = vcmask 261120
    %4 = vst.msk [vmem:[#allocation0] ss:$8 sm:$0xf] %vm3, %v2
    %s5 = scalar_lea.vmem %s0, 3
    %v6 = vld [vmem:[%s5] ss:$4 sm:$0xf]
    %7 = vrot.lane.b32.xlu0 %v6, 96
    %v8 = vpop.permute.xlu0 %7
    %vm9 = vcmask 1048320
    %10 = vst.msk [vmem:[#allocation0] ss:$8 sm:$0xf] %vm9, %v8
    %s11 = scalar_lea.vmem %s0, 2
    %v12 = vld [vmem:[%s11] ss:$4 sm:$0xf]
    %13 = vrot.lane.b32.xlu0 %v12, 64
    %v14 = vpop.permute.xlu0 %13
    %vm15 = vcmask 785920
    %16 = vst.msk [vmem:[#allocation0] ss:$8 sm:$0xf] %vm15, %v14
    %s17 = scalar_lea.vmem %s0, 1
    %v18 = vld [vmem:[%s17] ss:$4 sm:$0xf]
    %19 = vrot.lane.b32.xlu0 %v18, 32
    %v20 = vpop.permute.xlu0 %19
    %vm21 = vcmask 523520
    %22 = vst.msk [vmem:[#allocation0] ss:$8 sm:$0xf] %vm21, %v20
    %s24 = sshllo.u32 0, 1
    %v26 = vld [vmem:[#allocation0] sm:%s24]
    %s27 = sshllo.u32 0, 1
    %28 = vst [vmem:[%s1] sm:%s27] %v26
    %s29 = scalar_lea.vmem [#allocation0], 8
    %v30 = vld [vmem:[%s29] sm:%s24]
    %s31 = sshllo.u32 0, 1
    %s32 = scalar_lea.vmem %s1, 1
    %33 = vst [vmem:[%s32] sm:%s31] %v30
    %s34 = scalar_lea.vmem [#allocation0], 16
    %v35 = vld [vmem:[%s34] sm:%s24]
    %s36 = sshllo.u32 0, 1
    %s37 = smul.addr 1, 2
    %s38 = scalar_lea.vmem %s1, %s37
    %39 = vst [vmem:[%s38] sm:%s36] %v35
    %s40 = scalar_lea.vmem [#allocation0], 24
    %v41 = vld [vmem:[%s40] sm:%s24]
    %s42 = sshllo.u32 0, 1
    %s43 = smul.addr 1, 3
    %s44 = scalar_lea.vmem %s1, %s43
    %45 = vst [vmem:[%s44] sm:%s42] %v41

// kernel: time2vec.1
$region0: #{time2vec.1}
  #allocation0 [shape = 'u32[]', space=smem, size = 0x4, offset = 0x4, fixed_abs, tag = 'smem constant byte address 0x4 - core index']
  #allocation1 [shape = 'u32[144,128]{1,0:T(1,128)}', space=vmem, size = 0x12000, scoped, tag = 'internal scratch']
  %s0 = inlined_call_operand.vmem [shape: f32[16,17], index: 0, kind: input, shape index: {}]
  %s1 = inlined_call_operand.vmem [shape: f32[17,512], index: 1, kind: input, shape index: {}]
  %s2 = inlined_call_operand.vmem [shape: f32[1,512], index: 2, kind: input, shape index: {}]
  %s3 = inlined_call_operand.vmem [shape: f32[1,512], index: 3, kind: output, shape index: {}]
  %s4 = sld [smem:[#allocation0]]
  $region52: #{time2vec.1} parent=0
    _
  %s6 = ssub.s32 1, %s4
  %s7 = scalar_select 0, %s6, %s4
  $region1: #{time2vec.1} parent=0
    #allocation2 [shape = 'u8[32768]{0}', space=vmem, size = 0x8000, scoped, tag = 'output window, operand 0, single buffered']
    // Predicated region
    $region2: #{time2vec.1} parent=1 // pred_check
      _
    $region3: #{time2vec.1} parent=1 // pred_check_branch
      %9 = sbr.rel (0) target = $region5
    $region4: #{time2vec.1} parent=1 // pred_region
      _
    $region5: #{time2vec.1} parent=1 // pred_fallthru
      _
    // Predicated region
    $region6: #{time2vec.1} parent=1 // pred_check
      _
    $region7: #{time2vec.1} parent=1 // pred_check_branch
      %11 = sbr.rel (0) target = $region9
    $region8: #{time2vec.1} parent=1 // pred_region
      _
    $region9: #{time2vec.1} parent=1 // pred_fallthru
      _
    // Predicated region
    $region10: #{time2vec.1} parent=1 // pred_check
      _
    $region11: #{time2vec.1} parent=1 // pred_check_branch
      %13 = sbr.rel (0) target = $region13
    $region12: #{time2vec.1} parent=1 // pred_region
      _
    $region13: #{time2vec.1} parent=1 // pred_fallthru
      _
    %v14 = vld [vmem:[%s0] sm:$0xff]
    %v15 = vld [vmem:[%s0 + $0x8] sm:$0xff]
    %v16 = vld [vmem:[%s1] sm:$0xff]
    %v17 = vld [vmem:[%s1 + $0x8] sm:$0xff]
    %v18 = vld [vmem:[%s1 + $0x10] sm:$0xff]
    %v19 = vld [vmem:[%s1 + $0x18] sm:$0xff]
    %v20 = vld [vmem:[%s1 + $0x20] sm:$0xff]
    %v21 = vld [vmem:[%s1 + $0x28] sm:$0xff]
    %v22 = vld [vmem:[%s1 + $0x30] sm:$0xff]
    %v23 = vld [vmem:[%s1 + $0x38] sm:$0xff]
    %v24 = vld [vmem:[%s1 + $0x40] sm:$0x1]
    %v25 = vld [vmem:[%s1 + $0x48] sm:$0x1]
    %v26 = vld [vmem:[%s1 + $0x50] sm:$0x1]
    %v27 = vld [vmem:[%s1 + $0x58] sm:$0x1]
    %vm28 = vcmask 138240
    %v30 = vsel %vm28, %v14, 0
    %v33 = vsel %vm28, %v15, 0
    %vm35 = vcmask 1040384
    %v37 = vsel %vm35, %v24, 0
    %v40 = vsel %vm35, %v25, 0
    %v43 = vsel %vm35, %v26, 0
    %v46 = vsel %vm35, %v27, 0
    %v48 = vand.u32 %v17, 4294901760
    %49 = vmatprep.subr.mxu0 %v48
    %v50 = vand.u32 %v16, 4294901760
    %51 = vmatpush1.msra.mxu0 %v50
    %v52 = vand.u32 %v21, 4294901760
    %53 = vmatprep.subr.mxu0 %v52
    %v54 = vand.u32 %v20, 4294901760
    %55 = vmatpush1.msra.mxu0 %v54
    %v56 = vand.u32 %v40, 4294901760
    %57 = vmatprep.subr.mxu0 %v56
    %v58 = vand.u32 %v37, 4294901760
    %59 = vmatpush1.msra.mxu0 %v58
    %60 = vmatprep.subr.mxu0 0.0
    %61 = vmatpush1.msra.mxu0 0.0
    %62 = vmatprep.subr.mxu0 0.0
    %63 = vmatpush1.msra.mxu0 0.0
    %64 = vmatprep.subr.mxu0 0.0
    %65 = vmatpush1.msra.mxu0 0.0
    %66 = vmatprep.subr.mxu0 0.0
    %67 = vmatpush1.msra.mxu0 0.0
    %68 = vmatprep.subr.mxu0 0.0
    %69 = vmatpush1.msra.mxu0 0.0
    %70 = vmatprep.subr.mxu0 0.0
    %71 = vmatpush1.msra.mxu0 0.0
    %72 = vmatprep.subr.mxu0 0.0
    %73 = vmatpush1.msra.mxu0 0.0
    %74 = vmatprep.subr.mxu0 0.0
    %75 = vmatpush1.msra.mxu0 0.0
    %76 = vmatprep.subr.mxu0 0.0
    %77 = vmatpush1.msra.mxu0 0.0
    %78 = vmatprep.subr.mxu0 0.0
    %79 = vmatpush1.msra.mxu0 0.0
    %80 = vmatprep.subr.mxu0 0.0
    %81 = vmatpush1.msra.mxu0 0.0
    %82 = vmatprep.subr.mxu0 0.0
    %83 = vmatpush1.msra.mxu0 0.0
    %84 = vmatprep.subr.mxu0 0.0
    %85 = vmatpush1.msra.mxu0 0.0
    %86 = vmatprep.subr.mxu0 0.0
    %87 = vmatpush1.msra.mxu0 0.0
    %88 = vmatprep.subr.mxu0 0.0
    %89 = vmatpush1.msra.mxu0 0.0
    %90 = vmatprep.subr.mxu0 0.0
    %91 = vmatpush1.msra.mxu0 0.0
    %92 = vmatprep.subr.mxu0 0.0
    %93 = vmatpush1.msra.mxu0 0.0
    %94 = vmatprep.subr.mxu0 0.0
    %95 = vmatpush1.msra.mxu0 0.0
    %96 = vmatprep.subr.mxu0 0.0
    %97 = vmatpush1.msra.mxu0 0.0
    %98 = vmatprep.subr.mxu0 0.0
    %99 = vmatpush1.msra.mxu0 0.0
    %100 = vmatprep.subr.mxu0 0.0
    %101 = vmatpush1.msra.mxu0 0.0
    %102 = vmatprep.subr.mxu0 0.0
    %103 = vmatpush1.msra.mxu0 0.0
    %104 = vmatprep.subr.mxu0 0.0
    %105 = vmatpush1.msra.mxu0 0.0
    %106 = vmatprep.subr.mxu0 0.0
    %107 = vmatpush1.msra.mxu0 0.0
    %108 = vmatprep.subr.mxu0 0.0
    %109 = vmatpush1.msra.mxu0 0.0
    %110 = vmatprep.subr.mxu0 0.0
    %111 = vmatpush1.msra.mxu0 0.0
    %112 = vmatprep.subr.mxu0 0.0
    %113 = vmatpush1.msra.mxu0 0.0
    %114 = vmatprep.subr.mxu0 0.0
    %115 = vmatpush1.msra.mxu0 0.0
    %116 = vmatprep.subr.mxu0 0.0
    %117 = vmatpush1.msra.mxu0 0.0
    %118 = vmatprep.mubr.f32.mxu0 0.0
    %v119 = vand.u32 %v30, 4294901760
    %v120 = vsub.f32 %v30, %v119
    %v121 = vand.u32 %v120, 4294901760
    %v122 = vsub.f32 %v120, %v121
    %v123 = vand.u32 %v122, 4294901760
    %124 = vmatmul.mubr.f32.gmra.mrb[0].mxu0 %v123
    %v125 = vpop.f32.mrb[0].mxu0
    %v126 = vadd.f32 0.0, %v125
    %v127 = vpop.f32.mrb[0].mxu0
    %v128 = vadd.f32 0.0, %v127
    %129 = vmatprep.mubr.f32.mxu0 0.0
    %v130 = vand.u32 %v33, 4294901760
    %v131 = vsub.f32 %v33, %v130
    %v132 = vand.u32 %v131, 4294901760
    %v133 = vsub.f32 %v131, %v132
    %v134 = vand.u32 %v133, 4294901760
    %135 = vmatmul.mubr.f32.gmra.mrb[0].mxu0 %v134
    %v136 = vpop.f32.mrb[0].mxu0
    %v137 = vadd.f32 0.0, %v136
    %v138 = vpop.f32.mrb[0].mxu0
    %v139 = vadd.f32 0.0, %v138
    %140 = vdwg.mxu0
    %v141 = vand.u32 %v17, 4294901760
    %v142 = vsub.f32 %v17, %v141
    %v143 = vand.u32 %v142, 4294901760
    %v144 = vsub.f32 %v142, %v143
    %v145 = vand.u32 %v144, 4294901760
    %146 = vmatprep.subr.mxu0 %v145
    %v147 = vand.u32 %v16, 4294901760
    %v148 = vsub.f32 %v16, %v147
    %v149 = vand.u32 %v148, 4294901760
    %v150 = vsub.f32 %v148, %v149
    %v151 = vand.u32 %v150, 4294901760
    %152 = vmatpush1.msra.mxu0 %v151
    %v153 = vand.u32 %v21, 4294901760
    %v154 = vsub.f32 %v21, %v153
    %v155 = vand.u32 %v154, 4294901760
    %v156 = vsub.f32 %v154, %v155
    %v157 = vand.u32 %v156, 4294901760
    %158 = vmatprep.subr.mxu0 %v157
    %v159 = vand.u32 %v20, 4294901760
    %v160 = vsub.f32 %v20, %v159
    %v161 = vand.u32 %v160, 4294901760
    %v162 = vsub.f32 %v160, %v161
    %v163 = vand.u32 %v162, 4294901760
    %164 = vmatpush1.msra.mxu0 %v163
    %v165 = vand.u32 %v40, 4294901760
    %v166 = vsub.f32 %v40, %v165
    %v167 = vand.u32 %v166, 4294901760
    %v168 = vsub.f32 %v166, %v167
    %v169 = vand.u32 %v168, 4294901760
    %170 = vmatprep.subr.mxu0 %v169
    %v171 = vand.u32 %v37, 4294901760
    %v172 = vsub.f32 %v37, %v171
    %v173 = vand.u32 %v172, 4294901760
    %v174 = vsub.f32 %v172, %v173
    %v175 = vand.u32 %v174, 4294901760
    %176 = vmatpush1.msra.mxu0 %v175
    %177 = vmatprep.subr.mxu0 0.0
    %178 = vmatpush1.msra.mxu0 0.0
    %179 = vmatprep.subr.mxu0 0.0
    %180 = vmatpush1.msra.mxu0 0.0
    %181 = vmatprep.subr.mxu0 0.0
    %182 = vmatpush1.msra.mxu0 0.0
    %183 = vmatprep.subr.mxu0 0.0
    %184 = vmatpush1.msra.mxu0 0.0
    %185 = vmatprep.subr.mxu0 0.0
    %186 = vmatpush1.msra.mxu0 0.0
    %187 = vmatprep.subr.mxu0 0.0
    %188 = vmatpush1.msra.mxu0 0.0
    %189 = vmatprep.subr.mxu0 0.0
    %190 = vmatpush1.msra.mxu0 0.0
    %191 = vmatprep.subr.mxu0 0.0
    %192 = vmatpush1.msra.mxu0 0.0
    %193 = vmatprep.subr.mxu0 0.0
    %194 = vmatpush1.msra.mxu0 0.0
    %195 = vmatprep.subr.mxu0 0.0
    %196 = vmatpush1.msra.mxu0 0.0
    %197 = vmatprep.subr.mxu0 0.0
    %198 = vmatpush1.msra.mxu0 0.0
    %199 = vmatprep.subr.mxu0 0.0
    %200 = vmatpush1.msra.mxu0 0.0
    %201 = vmatprep.subr.mxu0 0.0
    %202 = vmatpush1.msra.mxu0 0.0
    %203 = vmatprep.subr.mxu0 0.0
    %204 = vmatpush1.msra.mxu0 0.0
    %205 = vmatprep.subr.mxu0 0.0
    %206 = vmatpush1.msra.mxu0 0.0
    %207 = vmatprep.subr.mxu0 0.0
    %208 = vmatpush1.msra.mxu0 0.0
    %209 = vmatprep.subr.mxu0 0.0
    %210 = vmatpush1.msra.mxu0 0.0
    %211 = vmatprep.subr.mxu0 0.0
    %212 = vmatpush1.msra.mxu0 0.0
    %213 = vmatprep.subr.mxu0 0.0
    %214 = vmatpush1.msra.mxu0 0.0
    %215 = vmatprep.subr.mxu0 0.0
    %216 = vmatpush1.msra.mxu0 0.0
    %217 = vmatprep.subr.mxu0 0.0
    %218 = vmatpush1.msra.mxu0 0.0
    %219 = vmatprep.subr.mxu0 0.0
    %220 = vmatpush1.msra.mxu0 0.0
    %221 = vmatprep.subr.mxu0 0.0
    %222 = vmatpush1.msra.mxu0 0.0
    %223 = vmatprep.subr.mxu0 0.0
    %224 = vmatpush1.msra.mxu0 0.0
    %225 = vmatprep.subr.mxu0 0.0
    %226 = vmatpush1.msra.mxu0 0.0
    %227 = vmatprep.subr.mxu0 0.0
    %228 = vmatpush1.msra.mxu0 0.0
    %229 = vmatprep.subr.mxu0 0.0
    %230 = vmatpush1.msra.mxu0 0.0
    %231 = vmatprep.subr.mxu0 0.0
    %232 = vmatpush1.msra.mxu0 0.0
    %233 = vmatprep.subr.mxu0 0.0
    %234 = vmatpush1.msra.mxu0 0.0
    %235 = vmatprep.mubr.f32.mxu0 0.0
    %v236 = vand.u32 %v30, 4294901760
    %237 = vmatmul.mubr.f32.gmra.mrb[0].mxu0 %v236
    %v238 = vpop.f32.mrb[0].mxu0
    %v239 = vadd.f32 %v126, %v238
    %v240 = vpop.f32.mrb[0].mxu0
    %v241 = vadd.f32 %v128, %v240
    %242 = vmatprep.mubr.f32.mxu0 0.0
    %v243 = vand.u32 %v33, 4294901760
    %244 = vmatmul.mubr.f32.gmra.mrb[0].mxu0 %v243
    %v245 = vpop.f32.mrb[0].mxu0
    %v246 = vadd.f32 %v137, %v245
    %v247 = vpop.f32.mrb[0].mxu0
    %v248 = vadd.f32 %v139, %v247
    %249 = vdwg.mxu0
    %v250 = vand.u32 %v17, 4294901760
    %v251 = vsub.f32 %v17, %v250
    %252 = vmatprep.subr.mxu0 %v251
    %v253 = vand.u32 %v16, 4294901760
    %v254 = vsub.f32 %v16, %v253
    %255 = vmatpush1.msra.mxu0 %v254
    %v256 = vand.u32 %v21, 4294901760
    %v257 = vsub.f32 %v21, %v256
    %258 = vmatprep.subr.mxu0 %v257
    %v259 = vand.u32 %v20, 4294901760
    %v260 = vsub.f32 %v20, %v259
    %261 = vmatpush1.msra.mxu0 %v260
    %v262 = vand.u32 %v40, 4294901760
    %v263 = vsub.f32 %v40, %v262
    %264 = vmatprep.subr.mxu0 %v263
    %v265 = vand.u32 %v37, 4294901760
    %v266 = vsub.f32 %v37, %v265
    %267 = vmatpush1.msra.mxu0 %v266
    %268 = vmatprep.subr.mxu0 0.0
    %269 = vmatpush1.msra.mxu0 0.0
    %270 = vmatprep.subr.mxu0 0.0
    %271 = vmatpush1.msra.mxu0 0.0
    %272 = vmatprep.subr.mxu0 0.0
    %273 = vmatpush1.msra.mxu0 0.0
    %274 = vmatprep.subr.mxu0 0.0
    %275 = vmatpush1.msra.mxu0 0.0
    %276 = vmatprep.subr.mxu0 0.0
    %277 = vmatpush1.msra.mxu0 0.0
    %278 = vmatprep.subr.mxu0 0.0
    %279 = vmatpush1.msra.mxu0 0.0
    %280 = vmatprep.subr.mxu0 0.0
    %281 = vmatpush1.msra.mxu0 0.0
    %282 = vmatprep.subr.mxu0 0.0
    %283 = vmatpush1.msra.mxu0 0.0
    %284 = vmatprep.subr.mxu0 0.0
    %285 = vmatpush1.msra.mxu0 0.0
    %286 = vmatprep.subr.mxu0 0.0
    %287 = vmatpush1.msra.mxu0 0.0
    %288 = vmatprep.subr.mxu0 0.0
    %289 = vmatpush1.msra.mxu0 0.0
    %290 = vmatprep.subr.mxu0 0.0
    %291 = vmatpush1.msra.mxu0 0.0
    %292 = vmatprep.subr.mxu0 0.0
    %293 = vmatpush1.msra.mxu0 0.0
    %294 = vmatprep.subr.mxu0 0.0
    %295 = vmatpush1.msra.mxu0 0.0
    %296 = vmatprep.subr.mxu0 0.0
    %297 = vmatpush1.msra.mxu0 0.0
    %298 = vmatprep.subr.mxu0 0.0
    %299 = vmatpush1.msra.mxu0 0.0
    %300 = vmatprep.subr.mxu0 0.0
    %301 = vmatpush1.msra.mxu0 0.0
    %302 = vmatprep.subr.mxu0 0.0
    %303 = vmatpush1.msra.mxu0 0.0
    %304 = vmatprep.subr.mxu0 0.0
    %305 = vmatpush1.msra.mxu0 0.0
    %306 = vmatprep.subr.mxu0 0.0
    %307 = vmatpush1.msra.mxu0 0.0
    %308 = vmatprep.subr.mxu0 0.0
    %309 = vmatpush1.msra.mxu0 0.0
    %310 = vmatprep.subr.mxu0 0.0
    %311 = vmatpush1.msra.mxu0 0.0
    %312 = vmatprep.subr.mxu0 0.0
    %313 = vmatpush1.msra.mxu0 0.0
    %314 = vmatprep.subr.mxu0 0.0
    %315 = vmatpush1.msra.mxu0 0.0
    %316 = vmatprep.subr.mxu0 0.0
    %317 = vmatpush1.msra.mxu0 0.0
    %318 = vmatprep.subr.mxu0 0.0
    %319 = vmatpush1.msra.mxu0 0.0
    %320 = vmatprep.subr.mxu0 0.0
    %321 = vmatpush1.msra.mxu0 0.0
    %322 = vmatprep.subr.mxu0 0.0
    %323 = vmatpush1.msra.mxu0 0.0
    %324 = vmatprep.subr.mxu0 0.0
    %325 = vmatpush1.msra.mxu0 0.0
    %326 = vmatprep.mubr.f32.mxu0 0.0
    %v327 = vand.u32 %v30, 4294901760
    %v328 = vsub.f32 %v30, %v327
    %329 = vmatmul.mubr.f32.gmra.mrb[0].mxu0 %v328
    %v330 = vpop.f32.mrb[0].mxu0
    %v331 = vadd.f32 %v239, %v330
    %v332 = vpop.f32.mrb[0].mxu0
    %v333 = vadd.f32 %v241, %v332
    %334 = vmatprep.mubr.f32.mxu0 0.0
    %v335 = vand.u32 %v33, 4294901760
    %v336 = vsub.f32 %v33, %v335
    %337 = vmatmul.mubr.f32.gmra.mrb[0].mxu0 %v336
    %v338 = vpop.f32.mrb[0].mxu0
    %v339 = vadd.f32 %v246, %v338
    %v340 = vpop.f32.mrb[0].mxu0
    %v341 = vadd.f32 %v248, %v340
    %342 = vdwg.mxu0
    %v343 = vand.u32 %v17, 4294901760
    %344 = vmatprep.subr.mxu0 %v343
    %v345 = vand.u32 %v16, 4294901760
    %346 = vmatpush1.msra.mxu0 %v345
    %v347 = vand.u32 %v21, 4294901760
    %348 = vmatprep.subr.mxu0 %v347
    %v349 = vand.u32 %v20, 4294901760
    %350 = vmatpush1.msra.mxu0 %v349
    %v351 = vand.u32 %v40, 4294901760
    %352 = vmatprep.subr.mxu0 %v351
    %v353 = vand.u32 %v37, 4294901760
    %354 = vmatpush1.msra.mxu0 %v353
    %355 = vmatprep.subr.mxu0 0.0
    %356 = vmatpush1.msra.mxu0 0.0
    %357 = vmatprep.subr.mxu0 0.0
    %358 = vmatpush1.msra.mxu0 0.0
    %359 = vmatprep.subr.mxu0 0.0
    %360 = vmatpush1.msra.mxu0 0.0
    %361 = vmatprep.subr.mxu0 0.0
    %362 = vmatpush1.msra.mxu0 0.0
    %363 = vmatprep.subr.mxu0 0.0
    %364 = vmatpush1.msra.mxu0 0.0
    %365 = vmatprep.subr.mxu0 0.0
    %366 = vmatpush1.msra.mxu0 0.0
    %367 = vmatprep.subr.mxu0 0.0
    %368 = vmatpush1.msra.mxu0 0.0
    %369 = vmatprep.subr.mxu0 0.0
    %370 = vmatpush1.msra.mxu0 0.0
    %371 = vmatprep.subr.mxu0 0.0
    %372 = vmatpush1.msra.mxu0 0.0
    %373 = vmatprep.subr.mxu0 0.0
    %374 = vmatpush1.msra.mxu0 0.0
    %375 = vmatprep.subr.mxu0 0.0
    %376 = vmatpush1.msra.mxu0 0.0
    %377 = vmatprep.subr.mxu0 0.0
    %378 = vmatpush1.msra.mxu0 0.0
    %379 = vmatprep.subr.mxu0 0.0
    %380 = vmatpush1.msra.mxu0 0.0
    %381 = vmatprep.subr.mxu0 0.0
    %382 = vmatpush1.msra.mxu0 0.0
    %383 = vmatprep.subr.mxu0 0.0
    %384 = vmatpush1.msra.mxu0 0.0
    %385 = vmatprep.subr.mxu0 0.0
    %386 = vmatpush1.msra.mxu0 0.0
    %387 = vmatprep.subr.mxu0 0.0
    %388 = vmatpush1.msra.mxu0 0.0
    %389 = vmatprep.subr.mxu0 0.0
    %390 = vmatpush1.msra.mxu0 0.0
    %391 = vmatprep.subr.mxu0 0.0
    %392 = vmatpush1.msra.mxu0 0.0
    %393 = vmatprep.subr.mxu0 0.0
    %394 = vmatpush1.msra.mxu0 0.0
    %395 = vmatprep.subr.mxu0 0.0
    %396 = vmatpush1.msra.mxu0 0.0
    %397 = vmatprep.subr.mxu0 0.0
    %398 = vmatpush1.msra.mxu0 0.0
    %399 = vmatprep.subr.mxu0 0.0
    %400 = vmatpush1.msra.mxu0 0.0
    %401 = vmatprep.subr.mxu0 0.0
    %402 = vmatpush1.msra.mxu0 0.0
    %403 = vmatprep.subr.mxu0 0.0
    %404 = vmatpush1.msra.mxu0 0.0
    %405 = vmatprep.subr.mxu0 0.0
    %406 = vmatpush1.msra.mxu0 0.0
    %407 = vmatprep.subr.mxu0 0.0
    %408 = vmatpush1.msra.mxu0 0.0
    %409 = vmatprep.subr.mxu0 0.0
    %410 = vmatpush1.msra.mxu0 0.0
    %411 = vmatprep.subr.mxu0 0.0
    %412 = vmatpush1.msra.mxu0 0.0
    %413 = vmatprep.mubr.f32.mxu0 0.0
    %v414 = vand.u32 %v30, 4294901760
    %v415 = vsub.f32 %v30, %v414
    %v416 = vand.u32 %v415, 4294901760
    %417 = vmatmul.mubr.f32.gmra.mrb[0].mxu0 %v416
    %v418 = vpop.f32.mrb[0].mxu0
    %v419 = vadd.f32 %v331, %v418
    %v420 = vpop.f32.mrb[0].mxu0
    %v421 = vadd.f32 %v333, %v420
    %422 = vmatprep.mubr.f32.mxu0 0.0
    %v423 = vand.u32 %v33, 4294901760
    %v424 = vsub.f32 %v33, %v423
    %v425 = vand.u32 %v424, 4294901760
    %426 = vmatmul.mubr.f32.gmra.mrb[0].mxu0 %v425
    %v427 = vpop.f32.mrb[0].mxu0
    %v428 = vadd.f32 %v339, %v427
    %v429 = vpop.f32.mrb[0].mxu0
    %v430 = vadd.f32 %v341, %v429
    %431 = vdwg.mxu0
    %v432 = vand.u32 %v17, 4294901760
    %v433 = vsub.f32 %v17, %v432
    %v434 = vand.u32 %v433, 4294901760
    %435 = vmatprep.subr.mxu0 %v434
    %v436 = vand.u32 %v16, 4294901760
    %v437 = vsub.f32 %v16, %v436
    %v438 = vand.u32 %v437, 4294901760
    %439 = vmatpush1.msra.mxu0 %v438
    %v440 = vand.u32 %v21, 4294901760
    %v441 = vsub.f32 %v21, %v440
    %v442 = vand.u32 %v441, 4294901760
    %443 = vmatprep.subr.mxu0 %v442
    %v444 = vand.u32 %v20, 4294901760
    %v445 = vsub.f32 %v20, %v444
    %v446 = vand.u32 %v445, 4294901760
    %447 = vmatpush1.msra.mxu0 %v446
    %v448 = vand.u32 %v40, 4294901760
    %v449 = vsub.f32 %v40, %v448
    %v450 = vand.u32 %v449, 4294901760
    %451 = vmatprep.subr.mxu0 %v450
    %v452 = vand.u32 %v37, 4294901760
    %v453 = vsub.f32 %v37, %v452
    %v454 = vand.u32 %v453, 4294901760
    %455 = vmatpush1.msra.mxu0 %v454
    %456 = vmatprep.subr.mxu0 0.0
    %457 = vmatpush1.msra.mxu0 0.0
    %458 = vmatprep.subr.mxu0 0.0
    %459 = vmatpush1.msra.mxu0 0.0
    %460 = vmatprep.subr.mxu0 0.0
    %461 = vmatpush1.msra.mxu0 0.0
    %462 = vmatprep.subr.mxu0 0.0
    %463 = vmatpush1.msra.mxu0 0.0
    %464 = vmatprep.subr.mxu0 0.0
    %465 = vmatpush1.msra.mxu0 0.0
    %466 = vmatprep.subr.mxu0 0.0
    %467 = vmatpush1.msra.mxu0 0.0
    %468 = vmatprep.subr.mxu0 0.0
    %469 = vmatpush1.msra.mxu0 0.0
    %470 = vmatprep.subr.mxu0 0.0
    %471 = vmatpush1.msra.mxu0 0.0
    %472 = vmatprep.subr.mxu0 0.0
    %473 = vmatpush1.msra.mxu0 0.0
    %474 = vmatprep.subr.mxu0 0.0
    %475 = vmatpush1.msra.mxu0 0.0
    %476 = vmatprep.subr.mxu0 0.0
    %477 = vmatpush1.msra.mxu0 0.0
    %478 = vmatprep.subr.mxu0 0.0
    %479 = vmatpush1.msra.mxu0 0.0
    %480 = vmatprep.subr.mxu0 0.0
    %481 = vmatpush1.msra.mxu0 0.0
    %482 = vmatprep.subr.mxu0 0.0
    %483 = vmatpush1.msra.mxu0 0.0
    %484 = vmatprep.subr.mxu0 0.0
    %485 = vmatpush1.msra.mxu0 0.0
    %486 = vmatprep.subr.mxu0 0.0
    %487 = vmatpush1.msra.mxu0 0.0
    %488 = vmatprep.subr.mxu0 0.0
    %489 = vmatpush1.msra.mxu0 0.0
    %490 = vmatprep.subr.mxu0 0.0
    %491 = vmatpush1.msra.mxu0 0.0
    %492 = vmatprep.subr.mxu0 0.0
    %493 = vmatpush1.msra.mxu0 0.0
    %494 = vmatprep.subr.mxu0 0.0
    %495 = vmatpush1.msra.mxu0 0.0
    %496 = vmatprep.subr.mxu0 0.0
    %497 = vmatpush1.msra.mxu0 0.0
    %498 = vmatprep.subr.mxu0 0.0
    %499 = vmatpush1.msra.mxu0 0.0
    %500 = vmatprep.subr.mxu0 0.0
    %501 = vmatpush1.msra.mxu0 0.0
    %502 = vmatprep.subr.mxu0 0.0
    %503 = vmatpush1.msra.mxu0 0.0
    %504 = vmatprep.subr.mxu0 0.0
    %505 = vmatpush1.msra.mxu0 0.0
    %506 = vmatprep.subr.mxu0 0.0
    %507 = vmatpush1.msra.mxu0 0.0
    %508 = vmatprep.subr.mxu0 0.0
    %509 = vmatpush1.msra.mxu0 0.0
    %510 = vmatprep.subr.mxu0 0.0
    %511 = vmatpush1.msra.mxu0 0.0
    %512 = vmatprep.subr.mxu0 0.0
    %513 = vmatpush1.msra.mxu0 0.0
    %514 = vmatprep.mubr.f32.mxu0 0.0
    %v515 = vand.u32 %v30, 4294901760
    %516 = vmatmul.mubr.f32.gmra.mrb[0].mxu0 %v515
    %v517 = vpop.f32.mrb[0].mxu0
    %v518 = vadd.f32 %v419, %v517
    %v519 = vpop.f32.mrb[0].mxu0
    %v520 = vadd.f32 %v421, %v519
    %521 = vmatprep.mubr.f32.mxu0 0.0
    %v522 = vand.u32 %v33, 4294901760
    %523 = vmatmul.mubr.f32.gmra.mrb[0].mxu0 %v522
    %v524 = vpop.f32.mrb[0].mxu0
    %v525 = vadd.f32 %v428, %v524
    %v526 = vpop.f32.mrb[0].mxu0
    %v527 = vadd.f32 %v430, %v526
    %528 = vdwg.mxu0
    %v529 = vand.u32 %v17, 4294901760
    %530 = vmatprep.subr.mxu0 %v529
    %v531 = vand.u32 %v16, 4294901760
    %532 = vmatpush1.msra.mxu0 %v531
    %v533 = vand.u32 %v21, 4294901760
    %534 = vmatprep.subr.mxu0 %v533
    %v535 = vand.u32 %v20, 4294901760
    %536 = vmatpush1.msra.mxu0 %v535
    %v537 = vand.u32 %v40, 4294901760
    %538 = vmatprep.subr.mxu0 %v537
    %v539 = vand.u32 %v37, 4294901760
    %540 = vmatpush1.msra.mxu0 %v539
    %541 = vmatprep.subr.mxu0 0.0
    %542 = vmatpush1.msra.mxu0 0.0
    %543 = vmatprep.subr.mxu0 0.0
    %544 = vmatpush1.msra.mxu0 0.0
    %545 = vmatprep.subr.mxu0 0.0
    %546 = vmatpush1.msra.mxu0 0.0
    %547 = vmatprep.subr.mxu0 0.0
    %548 = vmatpush1.msra.mxu0 0.0
    %549 = vmatprep.subr.mxu0 0.0
    %550 = vmatpush1.msra.mxu0 0.0
    %551 = vmatprep.subr.mxu0 0.0
    %552 = vmatpush1.msra.mxu0 0.0
    %553 = vmatprep.subr.mxu0 0.0
    %554 = vmatpush1.msra.mxu0 0.0
    %555 = vmatprep.subr.mxu0 0.0
    %556 = vmatpush1.msra.mxu0 0.0
    %557 = vmatprep.subr.mxu0 0.0
    %558 = vmatpush1.msra.mxu0 0.0
    %559 = vmatprep.subr.mxu0 0.0
    %560 = vmatpush1.msra.mxu0 0.0
    %561 = vmatprep.subr.mxu0 0.0
    %562 = vmatpush1.msra.mxu0 0.0
    %563 = vmatprep.subr.mxu0 0.0
    %564 = vmatpush1.msra.mxu0 0.0
    %565 = vmatprep.subr.mxu0 0.0
    %566 = vmatpush1.msra.mxu0 0.0
    %567 = vmatprep.subr.mxu0 0.0
    %568 = vmatpush1.msra.mxu0 0.0
    %569 = vmatprep.subr.mxu0 0.0
    %570 = vmatpush1.msra.mxu0 0.0
    %571 = vmatprep.subr.mxu0 0.0
    %572 = vmatpush1.msra.mxu0 0.0
    %573 = vmatprep.subr.mxu0 0.0
    %574 = vmatpush1.msra.mxu0 0.0
    %575 = vmatprep.subr.mxu0 0.0
    %576 = vmatpush1.msra.mxu0 0.0
    %577 = vmatprep.subr.mxu0 0.0
    %578 = vmatpush1.msra.mxu0 0.0
    %579 = vmatprep.subr.mxu0 0.0
    %580 = vmatpush1.msra.mxu0 0.0
    %581 = vmatprep.subr.mxu0 0.0
    %582 = vmatpush1.msra.mxu0 0.0
    %583 = vmatprep.subr.mxu0 0.0
    %584 = vmatpush1.msra.mxu0 0.0
    %585 = vmatprep.subr.mxu0 0.0
    %586 = vmatpush1.msra.mxu0 0.0
    %587 = vmatprep.subr.mxu0 0.0
    %588 = vmatpush1.msra.mxu0 0.0
    %589 = vmatprep.subr.mxu0 0.0
    %590 = vmatpush1.msra.mxu0 0.0
    %591 = vmatprep.subr.mxu0 0.0
    %592 = vmatpush1.msra.mxu0 0.0
    %593 = vmatprep.subr.mxu0 0.0
    %594 = vmatpush1.msra.mxu0 0.0
    %595 = vmatprep.subr.mxu0 0.0
    %596 = vmatpush1.msra.mxu0 0.0
    %597 = vmatprep.subr.mxu0 0.0
    %598 = vmatpush1.msra.mxu0 0.0
    %599 = vmatprep.mubr.f32.mxu0 0.0
    %v600 = vand.u32 %v30, 4294901760
    %601 = vmatmul.mubr.f32.gmra.mrb[0].mxu0 %v600
    %v602 = vpop.f32.mrb[0].mxu0
    %v603 = vadd.f32 %v518, %v602
    %v604 = vpop.f32.mrb[0].mxu0
    %v605 = vadd.f32 %v520, %v604
    %606 = vmatprep.mubr.f32.mxu0 0.0
    %v607 = vand.u32 %v33, 4294901760
    %608 = vmatmul.mubr.f32.gmra.mrb[0].mxu0 %v607
    %v609 = vpop.f32.mrb[0].mxu0
    %v610 = vadd.f32 %v525, %v609
    %v611 = vpop.f32.mrb[0].mxu0
    %v612 = vadd.f32 %v527, %v611
    %613 = vdwg.mxu0
    %v614 = vand.u32 %v19, 4294901760
    %615 = vmatprep.subr.mxu0 %v614
    %v616 = vand.u32 %v18, 4294901760
    %617 = vmatpush1.msra.mxu0 %v616
    %v618 = vand.u32 %v23, 4294901760
    %619 = vmatprep.subr.mxu0 %v618
    %v620 = vand.u32 %v22, 4294901760
    %621 = vmatpush1.msra.mxu0 %v620
    %v622 = vand.u32 %v46, 4294901760
    %623 = vmatprep.subr.mxu0 %v622
    %v624 = vand.u32 %v43, 4294901760
    %625 = vmatpush1.msra.mxu0 %v624
    %626 = vmatprep.subr.mxu0 0.0
    %627 = vmatpush1.msra.mxu0 0.0
    %628 = vmatprep.subr.mxu0 0.0
    %629 = vmatpush1.msra.mxu0 0.0
    %630 = vmatprep.subr.mxu0 0.0
    %631 = vmatpush1.msra.mxu0 0.0
    %632 = vmatprep.subr.mxu0 0.0
    %633 = vmatpush1.msra.mxu0 0.0
    %634 = vmatprep.subr.mxu0 0.0
    %635 = vmatpush1.msra.mxu0 0.0
    %636 = vmatprep.subr.mxu0 0.0
    %637 = vmatpush1.msra.mxu0 0.0
    %638 = vmatprep.subr.mxu0 0.0
    %639 = vmatpush1.msra.mxu0 0.0
    %640 = vmatprep.subr.mxu0 0.0
    %641 = vmatpush1.msra.mxu0 0.0
    %642 = vmatprep.subr.mxu0 0.0
    %643 = vmatpush1.msra.mxu0 0.0
    %644 = vmatprep.subr.mxu0 0.0
    %645 = vmatpush1.msra.mxu0 0.0
    %646 = vmatprep.subr.mxu0 0.0
    %647 = vmatpush1.msra.mxu0 0.0
    %648 = vmatprep.subr.mxu0 0.0
    %649 = vmatpush1.msra.mxu0 0.0
    %650 = vmatprep.subr.mxu0 0.0
    %651 = vmatpush1.msra.mxu0 0.0
    %652 = vmatprep.subr.mxu0 0.0
    %653 = vmatpush1.msra.mxu0 0.0
    %654 = vmatprep.subr.mxu0 0.0
    %655 = vmatpush1.msra.mxu0 0.0
    %656 = vmatprep.subr.mxu0 0.0
    %657 = vmatpush1.msra.mxu0 0.0
    %658 = vmatprep.subr.mxu0 0.0
    %659 = vmatpush1.msra.mxu0 0.0
    %660 = vmatprep.subr.mxu0 0.0
    %661 = vmatpush1.msra.mxu0 0.0
    %662 = vmatprep.subr.mxu0 0.0
    %663 = vmatpush1.msra.mxu0 0.0
    %664 = vmatprep.subr.mxu0 0.0
    %665 = vmatpush1.msra.mxu0 0.0
    %666 = vmatprep.subr.mxu0 0.0
    %667 = vmatpush1.msra.mxu0 0.0
    %668 = vmatprep.subr.mxu0 0.0
    %669 = vmatpush1.msra.mxu0 0.0
    %670 = vmatprep.subr.mxu0 0.0
    %671 = vmatpush1.msra.mxu0 0.0
    %672 = vmatprep.subr.mxu0 0.0
    %673 = vmatpush1.msra.mxu0 0.0
    %674 = vmatprep.subr.mxu0 0.0
    %675 = vmatpush1.msra.mxu0 0.0
    %676 = vmatprep.subr.mxu0 0.0
    %677 = vmatpush1.msra.mxu0 0.0
    %678 = vmatprep.subr.mxu0 0.0
    %679 = vmatpush1.msra.mxu0 0.0
    %680 = vmatprep.subr.mxu0 0.0
    %681 = vmatpush1.msra.mxu0 0.0
    %682 = vmatprep.subr.mxu0 0.0
    %683 = vmatpush1.msra.mxu0 0.0
    %684 = vmatprep.mubr.f32.mxu0 0.0
    %v685 = vand.u32 %v30, 4294901760
    %v686 = vsub.f32 %v30, %v685
    %v687 = vand.u32 %v686, 4294901760
    %v688 = vsub.f32 %v686, %v687
    %v689 = vand.u32 %v688, 4294901760
    %690 = vmatmul.mubr.f32.gmra.mrb[0].mxu0 %v689
    %v691 = vpop.f32.mrb[0].mxu0
    %v692 = vadd.f32 0.0, %v691
    %v693 = vpop.f32.mrb[0].mxu0
    %v694 = vadd.f32 0.0, %v693
    %695 = vmatprep.mubr.f32.mxu0 0.0
    %v696 = vand.u32 %v33, 4294901760
    %v697 = vsub.f32 %v33, %v696
    %v698 = vand.u32 %v697, 4294901760
    %v699 = vsub.f32 %v697, %v698
    %v700 = vand.u32 %v699, 4294901760
    %701 = vmatmul.mubr.f32.gmra.mrb[0].mxu0 %v700
    %v702 = vpop.f32.mrb[0].mxu0
    %v703 = vadd.f32 0.0, %v702
    %v704 = vpop.f32.mrb[0].mxu0
    %v705 = vadd.f32 0.0, %v704
    %706 = vdwg.mxu0
    %v707 = vand.u32 %v19, 4294901760
    %v708 = vsub.f32 %v19, %v707
    %v709 = vand.u32 %v708, 4294901760
    %v710 = vsub.f32 %v708, %v709
    %v711 = vand.u32 %v710, 4294901760
    %712 = vmatprep.subr.mxu0 %v711
    %v713 = vand.u32 %v18, 4294901760
    %v714 = vsub.f32 %v18, %v713
    %v715 = vand.u32 %v714, 4294901760
    %v716 = vsub.f32 %v714, %v715
    %v717 = vand.u32 %v716, 4294901760
    %718 = vmatpush1.msra.mxu0 %v717
    %v719 = vand.u32 %v23, 4294901760
    %v720 = vsub.f32 %v23, %v719
    %v721 = vand.u32 %v720, 4294901760
    %v722 = vsub.f32 %v720, %v721
    %v723 = vand.u32 %v722, 4294901760
    %724 = vmatprep.subr.mxu0 %v723
    %v725 = vand.u32 %v22, 4294901760
    %v726 = vsub.f32 %v22, %v725
    %v727 = vand.u32 %v726, 4294901760
    %v728 = vsub.f32 %v726, %v727
    %v729 = vand.u32 %v728, 4294901760
    %730 = vmatpush1.msra.mxu0 %v729
    %v731 = vand.u32 %v46, 4294901760
    %v732 = vsub.f32 %v46, %v731
    %v733 = vand.u32 %v732, 4294901760
    %v734 = vsub.f32 %v732, %v733
    %v735 = vand.u32 %v734, 4294901760
    %736 = vmatprep.subr.mxu0 %v735
    %v737 = vand.u32 %v43, 4294901760
    %v738 = vsub.f32 %v43, %v737
    %v739 = vand.u32 %v738, 4294901760
    %v740 = vsub.f32 %v738, %v739
    %v741 = vand.u32 %v740, 4294901760
    %742 = vmatpush1.msra.mxu0 %v741
    %743 = vmatprep.subr.mxu0 0.0
    %744 = vmatpush1.msra.mxu0 0.0
    %745 = vmatprep.subr.mxu0 0.0
    %746 = vmatpush1.msra.mxu0 0.0
    %747 = vmatprep.subr.mxu0 0.0
    %748 = vmatpush1.msra.mxu0 0.0
    %749 = vmatprep.subr.mxu0 0.0
    %750 = vmatpush1.msra.mxu0 0.0
    %751 = vmatprep.subr.mxu0 0.0
    %752 = vmatpush1.msra.mxu0 0.0
    %753 = vmatprep.subr.mxu0 0.0
    %754 = vmatpush1.msra.mxu0 0.0
    %755 = vmatprep.subr.mxu0 0.0
    %756 = vmatpush1.msra.mxu0 0.0
    %757 = vmatprep.subr.mxu0 0.0
    %758 = vmatpush1.msra.mxu0 0.0
    %759 = vmatprep.subr.mxu0 0.0
    %760 = vmatpush1.msra.mxu0 0.0
    %761 = vmatprep.subr.mxu0 0.0
    %762 = vmatpush1.msra.mxu0 0.0
    %763 = vmatprep.subr.mxu0 0.0
    %764 = vmatpush1.msra.mxu0 0.0
    %765 = vmatprep.subr.mxu0 0.0
    %766 = vmatpush1.msra.mxu0 0.0
    %767 = vmatprep.subr.mxu0 0.0
    %768 = vmatpush1.msra.mxu0 0.0
    %769 = vmatprep.subr.mxu0 0.0
    %770 = vmatpush1.msra.mxu0 0.0
    %771 = vmatprep.subr.mxu0 0.0
    %772 = vmatpush1.msra.mxu0 0.0
    %773 = vmatprep.subr.mxu0 0.0
    %774 = vmatpush1.msra.mxu0 0.0
    %775 = vmatprep.subr.mxu0 0.0
    %776 = vmatpush1.msra.mxu0 0.0
    %777 = vmatprep.subr.mxu0 0.0
    %778 = vmatpush1.msra.mxu0 0.0
    %779 = vmatprep.subr.mxu0 0.0
    %780 = vmatpush1.msra.mxu0 0.0
    %781 = vmatprep.subr.mxu0 0.0
    %782 = vmatpush1.msra.mxu0 0.0
    %783 = vmatprep.subr.mxu0 0.0
    %784 = vmatpush1.msra.mxu0 0.0
    %785 = vmatprep.subr.mxu0 0.0
    %786 = vmatpush1.msra.mxu0 0.0
    %787 = vmatprep.subr.mxu0 0.0
    %788 = vmatpush1.msra.mxu0 0.0
    %789 = vmatprep.subr.mxu0 0.0
    %790 = vmatpush1.msra.mxu0 0.0
    %791 = vmatprep.subr.mxu0 0.0
    %792 = vmatpush1.msra.mxu0 0.0
    %793 = vmatprep.subr.mxu0 0.0
    %794 = vmatpush1.msra.mxu0 0.0
    %795 = vmatprep.subr.mxu0 0.0
    %796 = vmatpush1.msra.mxu0 0.0
    %797 = vmatprep.subr.mxu0 0.0
    %798 = vmatpush1.msra.mxu0 0.0
    %799 = vmatprep.subr.mxu0 0.0
    %800 = vmatpush1.msra.mxu0 0.0
    %801 = vmatprep.mubr.f32.mxu0 0.0
    %v802 = vand.u32 %v30, 4294901760
    %803 = vmatmul.mubr.f32.gmra.mrb[0].mxu0 %v802
    %v804 = vpop.f32.mrb[0].mxu0
    %v805 = vadd.f32 %v692, %v804
    %v806 = vpop.f32.mrb[0].mxu0
    %v807 = vadd.f32 %v694, %v806
    %808 = vmatprep.mubr.f32.mxu0 0.0
    %v809 = vand.u32 %v33, 4294901760
    %810 = vmatmul.mubr.f32.gmra.mrb[0].mxu0 %v809
    %v811 = vpop.f32.mrb[0].mxu0
    %v812 = vadd.f32 %v703, %v811
    %v813 = vpop.f32.mrb[0].mxu0
    %v814 = vadd.f32 %v705, %v813
    %815 = vdwg.mxu0
    %v816 = vand.u32 %v19, 4294901760
    %v817 = vsub.f32 %v19, %v816
    %818 = vmatprep.subr.mxu0 %v817
    %v819 = vand.u32 %v18, 4294901760
    %v820 = vsub.f32 %v18, %v819
    %821 = vmatpush1.msra.mxu0 %v820
    %v822 = vand.u32 %v23, 4294901760
    %v823 = vsub.f32 %v23, %v822
    %824 = vmatprep.subr.mxu0 %v823
    %v825 = vand.u32 %v22, 4294901760
    %v826 = vsub.f32 %v22, %v825
    %827 = vmatpush1.msra.mxu0 %v826
    %v828 = vand.u32 %v46, 4294901760
    %v829 = vsub.f32 %v46, %v828
    %830 = vmatprep.subr.mxu0 %v829
    %v831 = vand.u32 %v43, 4294901760
    %v832 = vsub.f32 %v43, %v831
    %833 = vmatpush1.msra.mxu0 %v832
    %834 = vmatprep.subr.mxu0 0.0
    %835 = vmatpush1.msra.mxu0 0.0
    %836 = vmatprep.subr.mxu0 0.0
    %837 = vmatpush1.msra.mxu0 0.0
    %838 = vmatprep.subr.mxu0 0.0
    %839 = vmatpush1.msra.mxu0 0.0
    %840 = vmatprep.subr.mxu0 0.0
    %841 = vmatpush1.msra.mxu0 0.0
    %842 = vmatprep.subr.mxu0 0.0
    %843 = vmatpush1.msra.mxu0 0.0
    %844 = vmatprep.subr.mxu0 0.0
    %845 = vmatpush1.msra.mxu0 0.0
    %846 = vmatprep.subr.mxu0 0.0
    %847 = vmatpush1.msra.mxu0 0.0
    %848 = vmatprep.subr.mxu0 0.0
    %849 = vmatpush1.msra.mxu0 0.0
    %850 = vmatprep.subr.mxu0 0.0
    %851 = vmatpush1.msra.mxu0 0.0
    %852 = vmatprep.subr.mxu0 0.0
    %853 = vmatpush1.msra.mxu0 0.0
    %854 = vmatprep.subr.mxu0 0.0
    %855 = vmatpush1.msra.mxu0 0.0
    %856 = vmatprep.subr.mxu0 0.0
    %857 = vmatpush1.msra.mxu0 0.0
    %858 = vmatprep.subr.mxu0 0.0
    %859 = vmatpush1.msra.mxu0 0.0
    %860 = vmatprep.subr.mxu0 0.0
    %861 = vmatpush1.msra.mxu0 0.0
    %862 = vmatprep.subr.mxu0 0.0
    %863 = vmatpush1.msra.mxu0 0.0
    %864 = vmatprep.subr.mxu0 0.0
    %865 = vmatpush1.msra.mxu0 0.0
    %866 = vmatprep.subr.mxu0 0.0
    %867 = vmatpush1.msra.mxu0 0.0
    %868 = vmatprep.subr.mxu0 0.0
    %869 = vmatpush1.msra.mxu0 0.0
    %870 = vmatprep.subr.mxu0 0.0
    %871 = vmatpush1.msra.mxu0 0.0
    %872 = vmatprep.subr.mxu0 0.0
    %873 = vmatpush1.msra.mxu0 0.0
    %874 = vmatprep.subr.mxu0 0.0
    %875 = vmatpush1.msra.mxu0 0.0
    %876 = vmatprep.subr.mxu0 0.0
    %877 = vmatpush1.msra.mxu0 0.0
    %878 = vmatprep.subr.mxu0 0.0
    %879 = vmatpush1.msra.mxu0 0.0
    %880 = vmatprep.subr.mxu0 0.0
    %881 = vmatpush1.msra.mxu0 0.0
    %882 = vmatprep.subr.mxu0 0.0
    %883 = vmatpush1.msra.mxu0 0.0
    %884 = vmatprep.subr.mxu0 0.0
    %885 = vmatpush1.msra.mxu0 0.0
    %886 = vmatprep.subr.mxu0 0.0
    %887 = vmatpush1.msra.mxu0 0.0
    %888 = vmatprep.subr.mxu0 0.0
    %889 = vmatpush1.msra.mxu0 0.0
    %890 = vmatprep.subr.mxu0 0.0
    %891 = vmatpush1.msra.mxu0 0.0
    %892 = vmatprep.mubr.f32.mxu0 0.0
    %v893 = vand.u32 %v30, 4294901760
    %v894 = vsub.f32 %v30, %v893
    %895 = vmatmul.mubr.f32.gmra.mrb[0].mxu0 %v894
    %v896 = vpop.f32.mrb[0].mxu0
    %v897 = vadd.f32 %v805, %v896
    %v898 = vpop.f32.mrb[0].mxu0
    %v899 = vadd.f32 %v807, %v898
    %900 = vmatprep.mubr.f32.mxu0 0.0
    %v901 = vand.u32 %v33, 4294901760
    %v902 = vsub.f32 %v33, %v901
    %903 = vmatmul.mubr.f32.gmra.mrb[0].mxu0 %v902
    %v904 = vpop.f32.mrb[0].mxu0
    %v905 = vadd.f32 %v812, %v904
    %v906 = vpop.f32.mrb[0].mxu0
    %v907 = vadd.f32 %v814, %v906
    %908 = vdwg.mxu0
    %v909 = vand.u32 %v19, 4294901760
    %910 = vmatprep.subr.mxu0 %v909
    %v911 = vand.u32 %v18, 4294901760
    %912 = vmatpush1.msra.mxu0 %v911
    %v913 = vand.u32 %v23, 4294901760
    %914 = vmatprep.subr.mxu0 %v913
    %v915 = vand.u32 %v22, 4294901760
    %916 = vmatpush1.msra.mxu0 %v915
    %v917 = vand.u32 %v46, 4294901760
    %918 = vmatprep.subr.mxu0 %v917
    %v919 = vand.u32 %v43, 4294901760
    %920 = vmatpush1.msra.mxu0 %v919
    %921 = vmatprep.subr.mxu0 0.0
    %922 = vmatpush1.msra.mxu0 0.0
    %923 = vmatprep.subr.mxu0 0.0
    %924 = vmatpush1.msra.mxu0 0.0
    %925 = vmatprep.subr.mxu0 0.0
    %926 = vmatpush1.msra.mxu0 0.0
    %927 = vmatprep.subr.mxu0 0.0
    %928 = vmatpush1.msra.mxu0 0.0
    %929 = vmatprep.subr.mxu0 0.0
    %930 = vmatpush1.msra.mxu0 0.0
    %931 = vmatprep.subr.mxu0 0.0
    %932 = vmatpush1.msra.mxu0 0.0
    %933 = vmatprep.subr.mxu0 0.0
    %934 = vmatpush1.msra.mxu0 0.0
    %935 = vmatprep.subr.mxu0 0.0
    %936 = vmatpush1.msra.mxu0 0.0
    %937 = vmatprep.subr.mxu0 0.0
    %938 = vmatpush1.msra.mxu0 0.0
    %939 = vmatprep.subr.mxu0 0.0
    %940 = vmatpush1.msra.mxu0 0.0
    %941 = vmatprep.subr.mxu0 0.0
    %942 = vmatpush1.msra.mxu0 0.0
    %943 = vmatprep.subr.mxu0 0.0
    %944 = vmatpush1.msra.mxu0 0.0
    %945 = vmatprep.subr.mxu0 0.0
    %946 = vmatpush1.msra.mxu0 0.0
    %947 = vmatprep.subr.mxu0 0.0
    %948 = vmatpush1.msra.mxu0 0.0
    %949 = vmatprep.subr.mxu0 0.0
    %950 = vmatpush1.msra.mxu0 0.0
    %951 = vmatprep.subr.mxu0 0.0
    %952 = vmatpush1.msra.mxu0 0.0
    %953 = vmatprep.subr.mxu0 0.0
    %954 = vmatpush1.msra.mxu0 0.0
    %955 = vmatprep.subr.mxu0 0.0
    %956 = vmatpush1.msra.mxu0 0.0
    %957 = vmatprep.subr.mxu0 0.0
    %958 = vmatpush1.msra.mxu0 0.0
    %959 = vmatprep.subr.mxu0 0.0
    %960 = vmatpush1.msra.mxu0 0.0
    %961 = vmatprep.subr.mxu0 0.0
    %962 = vmatpush1.msra.mxu0 0.0
    %963 = vmatprep.subr.mxu0 0.0
    %964 = vmatpush1.msra.mxu0 0.0
    %965 = vmatprep.subr.mxu0 0.0
    %966 = vmatpush1.msra.mxu0 0.0
    %967 = vmatprep.subr.mxu0 0.0
    %968 = vmatpush1.msra.mxu0 0.0
    %969 = vmatprep.subr.mxu0 0.0
    %970 = vmatpush1.msra.mxu0 0.0
    %971 = vmatprep.subr.mxu0 0.0
    %972 = vmatpush1.msra.mxu0 0.0
    %973 = vmatprep.subr.mxu0 0.0
    %974 = vmatpush1.msra.mxu0 0.0
    %975 = vmatprep.subr.mxu0 0.0
    %976 = vmatpush1.msra.mxu0 0.0
    %977 = vmatprep.subr.mxu0 0.0
    %978 = vmatpush1.msra.mxu0 0.0
    %979 = vmatprep.mubr.f32.mxu0 0.0
    %v980 = vand.u32 %v30, 4294901760
    %v981 = vsub.f32 %v30, %v980
    %v982 = vand.u32 %v981, 4294901760
    %983 = vmatmul.mubr.f32.gmra.mrb[0].mxu0 %v982
    %v984 = vpop.f32.mrb[0].mxu0
    %v985 = vadd.f32 %v897, %v984
    %v986 = vpop.f32.mrb[0].mxu0
    %v987 = vadd.f32 %v899, %v986
    %988 = vmatprep.mubr.f32.mxu0 0.0
    %v989 = vand.u32 %v33, 4294901760
    %v990 = vsub.f32 %v33, %v989
    %v991 = vand.u32 %v990, 4294901760
    %992 = vmatmul.mubr.f32.gmra.mrb[0].mxu0 %v991
    %v993 = vpop.f32.mrb[0].mxu0
    %v994 = vadd.f32 %v905, %v993
    %v995 = vpop.f32.mrb[0].mxu0
    %v996 = vadd.f32 %v907, %v995
    %997 = vdwg.mxu0
    %v998 = vand.u32 %v19, 4294901760
    %v999 = vsub.f32 %v19, %v998
    %v1000 = vand.u32 %v999, 4294901760
    %1001 = vmatprep.subr.mxu0 %v1000
    %v1002 = vand.u32 %v18, 4294901760
    %v1003 = vsub.f32 %v18, %v1002
    %v1004 = vand.u32 %v1003, 4294901760
    %1005 = vmatpush1.msra.mxu0 %v1004
    %v1006 = vand.u32 %v23, 4294901760
    %v1007 = vsub.f32 %v23, %v1006
    %v1008 = vand.u32 %v1007, 4294901760
    %1009 = vmatprep.subr.mxu0 %v1008
    %v1010 = vand.u32 %v22, 4294901760
    %v1011 = vsub.f32 %v22, %v1010
    %v1012 = vand.u32 %v1011, 4294901760
    %1013 = vmatpush1.msra.mxu0 %v1012
    %v1014 = vand.u32 %v46, 4294901760
    %v1015 = vsub.f32 %v46, %v1014
    %v1016 = vand.u32 %v1015, 4294901760
    %1017 = vmatprep.subr.mxu0 %v1016
    %v1018 = vand.u32 %v43, 4294901760
    %v1019 = vsub.f32 %v43, %v1018
    %v1020 = vand.u32 %v1019, 4294901760
    %1021 = vmatpush1.msra.mxu0 %v1020
    %1022 = vmatprep.subr.mxu0 0.0
    %1023 = vmatpush1.msra.mxu0 0.0
    %1024 = vmatprep.subr.mxu0 0.0
    %1025 = vmatpush1.msra.mxu0 0.0
    %1026 = vmatprep.subr.mxu0 0.0
    %1027 = vmatpush1.msra.mxu0 0.0
    %1028 = vmatprep.subr.mxu0 0.0
    %1029 = vmatpush1.msra.mxu0 0.0
    %1030 = vmatprep.subr.mxu0 0.0
    %1031 = vmatpush1.msra.mxu0 0.0
    %1032 = vmatprep.subr.mxu0 0.0
    %1033 = vmatpush1.msra.mxu0 0.0
    %1034 = vmatprep.subr.mxu0 0.0
    %1035 = vmatpush1.msra.mxu0 0.0
    %1036 = vmatprep.subr.mxu0 0.0
    %1037 = vmatpush1.msra.mxu0 0.0
    %1038 = vmatprep.subr.mxu0 0.0
    %1039 = vmatpush1.msra.mxu0 0.0
    %1040 = vmatprep.subr.mxu0 0.0
    %1041 = vmatpush1.msra.mxu0 0.0
    %1042 = vmatprep.subr.mxu0 0.0
    %1043 = vmatpush1.msra.mxu0 0.0
    %1044 = vmatprep.subr.mxu0 0.0
    %1045 = vmatpush1.msra.mxu0 0.0
    %1046 = vmatprep.subr.mxu0 0.0
    %1047 = vmatpush1.msra.mxu0 0.0
    %1048 = vmatprep.subr.mxu0 0.0
    %1049 = vmatpush1.msra.mxu0 0.0
    %1050 = vmatprep.subr.mxu0 0.0
    %1051 = vmatpush1.msra.mxu0 0.0
    %1052 = vmatprep.subr.mxu0 0.0
    %1053 = vmatpush1.msra.mxu0 0.0
    %1054 = vmatprep.subr.mxu0 0.0
    %1055 = vmatpush1.msra.mxu0 0.0
    %1056 = vmatprep.subr.mxu0 0.0
    %1057 = vmatpush1.msra.mxu0 0.0
    %1058 = vmatprep.subr.mxu0 0.0
    %1059 = vmatpush1.msra.mxu0 0.0
    %1060 = vmatprep.subr.mxu0 0.0
    %1061 = vmatpush1.msra.mxu0 0.0
    %1062 = vmatprep.subr.mxu0 0.0
    %1063 = vmatpush1.msra.mxu0 0.0
    %1064 = vmatprep.subr.mxu0 0.0
    %1065 = vmatpush1.msra.mxu0 0.0
    %1066 = vmatprep.subr.mxu0 0.0
    %1067 = vmatpush1.msra.mxu0 0.0
    %1068 = vmatprep.subr.mxu0 0.0
    %1069 = vmatpush1.msra.mxu0 0.0
    %1070 = vmatprep.subr.mxu0 0.0
    %1071 = vmatpush1.msra.mxu0 0.0
    %1072 = vmatprep.subr.mxu0 0.0
    %1073 = vmatpush1.msra.mxu0 0.0
    %1074 = vmatprep.subr.mxu0 0.0
    %1075 = vmatpush1.msra.mxu0 0.0
    %1076 = vmatprep.subr.mxu0 0.0
    %1077 = vmatpush1.msra.mxu0 0.0
    %1078 = vmatprep.subr.mxu0 0.0
    %1079 = vmatpush1.msra.mxu0 0.0
    %1080 = vmatprep.mubr.f32.mxu0 0.0
    %v1081 = vand.u32 %v30, 4294901760
    %1082 = vmatmul.mubr.f32.gmra.mrb[0].mxu0 %v1081
    %v1083 = vpop.f32.mrb[0].mxu0
    %v1084 = vadd.f32 %v985, %v1083
    %v1085 = vpop.f32.mrb[0].mxu0
    %v1086 = vadd.f32 %v987, %v1085
    %1087 = vmatprep.mubr.f32.mxu0 0.0
    %v1088 = vand.u32 %v33, 4294901760
    %1089 = vmatmul.mubr.f32.gmra.mrb[0].mxu0 %v1088
    %v1090 = vpop.f32.mrb[0].mxu0
    %v1091 = vadd.f32 %v994, %v1090
    %v1092 = vpop.f32.mrb[0].mxu0
    %v1093 = vadd.f32 %v996, %v1092
    %1094 = vdwg.mxu0
    %v1095 = vand.u32 %v19, 4294901760
    %1096 = vmatprep.subr.mxu0 %v1095
    %v1097 = vand.u32 %v18, 4294901760
    %1098 = vmatpush1.msra.mxu0 %v1097
    %v1099 = vand.u32 %v23, 4294901760
    %1100 = vmatprep.subr.mxu0 %v1099
    %v1101 = vand.u32 %v22, 4294901760
    %1102 = vmatpush1.msra.mxu0 %v1101
    %v1103 = vand.u32 %v46, 4294901760
    %1104 = vmatprep.subr.mxu0 %v1103
    %v1105 = vand.u32 %v43, 4294901760
    %1106 = vmatpush1.msra.mxu0 %v1105
    %1107 = vmatprep.subr.mxu0 0.0
    %1108 = vmatpush1.msra.mxu0 0.0
    %1109 = vmatprep.subr.mxu0 0.0
    %1110 = vmatpush1.msra.mxu0 0.0
    %1111 = vmatprep.subr.mxu0 0.0
    %1112 = vmatpush1.msra.mxu0 0.0
    %1113 = vmatprep.subr.mxu0 0.0
    %1114 = vmatpush1.msra.mxu0 0.0
    %1115 = vmatprep.subr.mxu0 0.0
    %1116 = vmatpush1.msra.mxu0 0.0
    %1117 = vmatprep.subr.mxu0 0.0
    %1118 = vmatpush1.msra.mxu0 0.0
    %1119 = vmatprep.subr.mxu0 0.0
    %1120 = vmatpush1.msra.mxu0 0.0
    %1121 = vmatprep.subr.mxu0 0.0
    %1122 = vmatpush1.msra.mxu0 0.0
    %1123 = vmatprep.subr.mxu0 0.0
    %1124 = vmatpush1.msra.mxu0 0.0
    %1125 = vmatprep.subr.mxu0 0.0
    %1126 = vmatpush1.msra.mxu0 0.0
    %1127 = vmatprep.subr.mxu0 0.0
    %1128 = vmatpush1.msra.mxu0 0.0
    %1129 = vmatprep.subr.mxu0 0.0
    %1130 = vmatpush1.msra.mxu0 0.0
    %1131 = vmatprep.subr.mxu0 0.0
    %1132 = vmatpush1.msra.mxu0 0.0
    %1133 = vmatprep.subr.mxu0 0.0
    %1134 = vmatpush1.msra.mxu0 0.0
    %1135 = vmatprep.subr.mxu0 0.0
    %1136 = vmatpush1.msra.mxu0 0.0
    %1137 = vmatprep.subr.mxu0 0.0
    %1138 = vmatpush1.msra.mxu0 0.0
    %1139 = vmatprep.subr.mxu0 0.0
    %1140 = vmatpush1.msra.mxu0 0.0
    %1141 = vmatprep.subr.mxu0 0.0
    %1142 = vmatpush1.msra.mxu0 0.0
    %1143 = vmatprep.subr.mxu0 0.0
    %1144 = vmatpush1.msra.mxu0 0.0
    %1145 = vmatprep.subr.mxu0 0.0
    %1146 = vmatpush1.msra.mxu0 0.0
    %1147 = vmatprep.subr.mxu0 0.0
    %1148 = vmatpush1.msra.mxu0 0.0
    %1149 = vmatprep.subr.mxu0 0.0
    %1150 = vmatpush1.msra.mxu0 0.0
    %1151 = vmatprep.subr.mxu0 0.0
    %1152 = vmatpush1.msra.mxu0 0.0
    %1153 = vmatprep.subr.mxu0 0.0
    %1154 = vmatpush1.msra.mxu0 0.0
    %1155 = vmatprep.subr.mxu0 0.0
    %1156 = vmatpush1.msra.mxu0 0.0
    %1157 = vmatprep.subr.mxu0 0.0
    %1158 = vmatpush1.msra.mxu0 0.0
    %1159 = vmatprep.subr.mxu0 0.0
    %1160 = vmatpush1.msra.mxu0 0.0
    %1161 = vmatprep.subr.mxu0 0.0
    %1162 = vmatpush1.msra.mxu0 0.0
    %1163 = vmatprep.subr.mxu0 0.0
    %1164 = vmatpush1.msra.mxu0 0.0
    %1165 = vmatprep.mubr.f32.mxu0 0.0
    %v1166 = vand.u32 %v30, 4294901760
    %1167 = vmatmul.mubr.f32.gmra.mrb[0].mxu0 %v1166
    %v1168 = vpop.f32.mrb[0].mxu0
    %v1169 = vadd.f32 %v1084, %v1168
    %v1170 = vpop.f32.mrb[0].mxu0
    %v1171 = vadd.f32 %v1086, %v1170
    %1172 = vmatprep.mubr.f32.mxu0 0.0
    %v1173 = vand.u32 %v33, 4294901760
    %1174 = vmatmul.mubr.f32.gmra.mrb[0].mxu0 %v1173
    %v1175 = vpop.f32.mrb[0].mxu0
    %v1176 = vadd.f32 %v1091, %v1175
    %v1177 = vpop.f32.mrb[0].mxu0
    %v1178 = vadd.f32 %v1093, %v1177
    %1179 = vdwg.mxu0
    %v1180 = vld [vmem:[%s2] sm:$0xf]
    %vm1181 = vcmp.gt.f32.partialorder %v1180, 0.5
    %v1182 = vand.u32 2147483647, %v603
    %vm1183 = vcmp.le.f32.partialorder %v1182, 0.7853982
    %vm1184 = vcmp.lt.s32.totalorder %v603, 0
    %v1185 = vand.u32 %v603, 2139095040
    %v1186 = vshrl.u32 %v1185, 23
    %v1187 = vsub.s32 %v1186, 127
    %v1188 = vand.u32 2147483647, %v603
    %v1189 = vand.u32 %v1188, 8388607
    %v1190 = vor.u32 %v1189, 8388608
    %v1191 = vsub.s32 0, %v1190
    %v1192 = vadd.s32 %v1187, 1
    %vm1193 = vcmp.gt.s32.totalorder %v1192, 0
    %v1194 = vsel %vm1193, %v1192, 0
    %v1195 = vshrl.u32 %v1194, 5
    %v1196 = vand.u32 %v1194, 31
    %v1197 = vsub.s32 32, %v1196
    %v1198 = vshrl.u32 683565275, %v1197
    %v1199 = vshll.u32 683565275, %v1196
    %v1200 = vshrl.u32 2475754826, %v1197
    %v1201 = vor.u32 %v1199, %v1200
    %v1202 = vshll.u32 2475754826, %v1196
    %v1203 = vshrl.u32 2131351028, %v1197
    %v1204 = vor.u32 %v1202, %v1203
    %v1205 = vshll.u32 2131351028, %v1196
    %v1206 = vshrl.u32 2102212464, %v1197
    %v1207 = vor.u32 %v1205, %v1206
    %v1208 = vshll.u32 2102212464, %v1196
    %v1209 = vshrl.u32 920167782, %v1197
    %v1210 = vor.u32 %v1208, %v1209
    %v1211 = vshll.u32 920167782, %v1196
    %v1212 = vshrl.u32 1326507024, %v1197
    %v1213 = vor.u32 %v1211, %v1212
    %vm1214 = vcmp.lt.s32.totalorder %v1195, 1
    %vm1215 = vcmp.lt.s32.totalorder %v1195, 2
    %vm1216 = vcmp.lt.s32.totalorder %v1195, 3
    %vm1217 = vcmp.lt.s32.totalorder %v1195, 4
    %v1218 = vsel %vm1214, %v1198, %v1201
    %v1219 = vsel %vm1217, %v1207, 2102212464
    %v1220 = vsel %vm1216, %v1204, %v1219
    %v1221 = vsel %vm1215, %v1218, %v1220
    %v1222 = vsel %vm1214, %v1201, %v1204
    %v1223 = vsel %vm1217, %v1210, 920167782
    %v1224 = vsel %vm1216, %v1207, %v1223
    %v1225 = vsel %vm1215, %v1222, %v1224
    %v1226 = vsel %vm1214, %v1204, %v1207
    %v1227 = vsel %vm1217, %v1213, 1326507024
    %v1228 = vsel %vm1216, %v1210, %v1227
    %v1229 = vsel %vm1215, %v1226, %v1228
    %v1230 = vshll.u32 %v1190, 8
    %v1231 = vmul.u32.u64.compose %v1230, %v1229
    %v1232 = vextract.low.u32 %v1231
    %v1233 = vextract.high.u32 %v1231
    %v1234 = vmul.u32.u64.compose %v1230, %v1225
    %v1235 = vextract.low.u32 %v1234
    %v1236 = vextract.high.u32 %v1234
    %v1237 = vmul.u32 %v1230, %v1221
    %v1238 = vadd.s32 %v1233, %v1235
    %vm1239 = vc.u32 %v1233, %v1235
    %v1240 = vadd.s32 %v1236, 1
    %v1241 = vsel %vm1239, %v1240, %v1236
    %v1242 = vadd.s32 %v1237, %v1241
    %v1243 = vadd.s32 %v1242, 536870912
    %v1244 = vshrl.u32 %v1243, 30
    %v1245 = vshll.u32 %v1244, 30
    %v1246 = vsub.s32 %v1242, %v1245
    %vm1247 = vcmp.lt.s32.totalorder %v1246, 0
    %v1248 = vsub.s32 0, %v1246
    %v1249 = vsel %vm1247, %v1248, %v1246
    %v1250 = vclz %v1249
    %v1251 = vsub.s32 %v1250, 2
    %vm1252 = vcmp.gt.s32.totalorder 0, %v1251
    %v1253 = vsel %vm1252, 0, %v1251
    %v1254 = vsub.s32 32, %v1253
    %v1255 = vshll.u32 %v1246, %v1253
    %v1256 = vshrl.u32 %v1238, %v1254
    %v1257 = vor.u32 %v1255, %v1256
    %v1258 = vsub.s32 4294967266, %v1253
    %v1259 = vadd.s32 %v1258, 127
    %v1260 = vshll.u32 %v1259, 23
    %v1261 = vor.u32 4788187, %v1260
    %v1262 = vand.u32 2147483647, %v1261
    %v1264 = vcvt.s32.f32 %v1257
    %v1265 = vmul.f32 %v1264, %v1262
    %v1266 = vxor.u32 %v1265, 2147483648
    %v1267 = vsel %vm1184, %v1266, %v1265
    %v1268 = vsub.s32 4, %v1244
    %v1269 = vsel %vm1184, %v1268, %v1244
    %v1270 = vsel %vm1183, %v603, %v1267
    %v1271 = vsel %vm1183, 0, %v1269
    %v1272 = vcosq.f32.pop %v1270
    %v1273 = vsinq.f32.pop %v1270
    %vm1274 = vweird.f32 %v603
    %v1275 = vadd.s32 %v1271, 3
    %v1276 = vand.u32 %v1275, 3
    %vm1277 = vcmp.lt.s32.totalorder %v1276, 2
    %vm1278 = vcmp.eq.s32.totalorder %v1276, 0
    %v1279 = vxor.u32 %v1273, 2147483648
    %v1280 = vsel %vm1278, %v1272, %v1279
    %vm1281 = vcmp.eq.s32.totalorder %v1276, 2
    %v1282 = vxor.u32 %v1272, 2147483648
    %v1283 = vsel %vm1281, %v1282, %v1273
    %v1284 = vsel %vm1277, %v1280, %v1283
    %v1285 = vsel %vm1274, nan, %v1284
    %v1286 = vand.u32 2147483647, %v605
    %vm1287 = vcmp.le.f32.partialorder %v1286, 0.7853982
    %vm1288 = vcmp.lt.s32.totalorder %v605, 0
    %v1289 = vand.u32 %v605, 2139095040
    %v1290 = vshrl.u32 %v1289, 23
    %v1291 = vsub.s32 %v1290, 127
    %v1292 = vand.u32 2147483647, %v605
    %v1293 = vand.u32 %v1292, 8388607
    %v1294 = vor.u32 %v1293, 8388608
    %v1295 = vsub.s32 0, %v1294
    %v1296 = vadd.s32 %v1291, 1
    %vm1297 = vcmp.gt.s32.totalorder %v1296, 0
    %v1298 = vsel %vm1297, %v1296, 0
    %v1299 = vshrl.u32 %v1298, 5
    %v1300 = vand.u32 %v1298, 31
    %v1301 = vsub.s32 32, %v1300
    %v1302 = vshrl.u32 683565275, %v1301
    %v1303 = vshll.u32 683565275, %v1300
    %v1304 = vshrl.u32 2475754826, %v1301
    %v1305 = vor.u32 %v1303, %v1304
    %v1306 = vshll.u32 2475754826, %v1300
    %v1307 = vshrl.u32 2131351028, %v1301
    %v1308 = vor.u32 %v1306, %v1307
    %v1309 = vshll.u32 2131351028, %v1300
    %v1310 = vshrl.u32 2102212464, %v1301
    %v1311 = vor.u32 %v1309, %v1310
    %v1312 = vshll.u32 2102212464, %v1300
    %v1313 = vshrl.u32 920167782, %v1301
    %v1314 = vor.u32 %v1312, %v1313
    %v1315 = vshll.u32 920167782, %v1300
    %v1316 = vshrl.u32 1326507024, %v1301
    %v1317 = vor.u32 %v1315, %v1316
    %vm1318 = vcmp.lt.s32.totalorder %v1299, 1
    %vm1319 = vcmp.lt.s32.totalorder %v1299, 2
    %vm1320 = vcmp.lt.s32.totalorder %v1299, 3
    %vm1321 = vcmp.lt.s32.totalorder %v1299, 4
    %v1322 = vsel %vm1318, %v1302, %v1305
    %v1323 = vsel %vm1321, %v1311, 2102212464
    %v1324 = vsel %vm1320, %v1308, %v1323
    %v1325 = vsel %vm1319, %v1322, %v1324
    %v1326 = vsel %vm1318, %v1305, %v1308
    %v1327 = vsel %vm1321, %v1314, 920167782
    %v1328 = vsel %vm1320, %v1311, %v1327
    %v1329 = vsel %vm1319, %v1326, %v1328
    %v1330 = vsel %vm1318, %v1308, %v1311
    %v1331 = vsel %vm1321, %v1317, 1326507024
    %v1332 = vsel %vm1320, %v1314, %v1331
    %v1333 = vsel %vm1319, %v1330, %v1332
    %v1334 = vshll.u32 %v1294, 8
    %v1335 = vmul.u32.u64.compose %v1334, %v1333
    %v1336 = vextract.low.u32 %v1335
    %v1337 = vextract.high.u32 %v1335
    %v1338 = vmul.u32.u64.compose %v1334, %v1329
    %v1339 = vextract.low.u32 %v1338
    %v1340 = vextract.high.u32 %v1338
    %v1341 = vmul.u32 %v1334, %v1325
    %v1342 = vadd.s32 %v1337, %v1339
    %vm1343 = vc.u32 %v1337, %v1339
    %v1344 = vadd.s32 %v1340, 1
    %v1345 = vsel %vm1343, %v1344, %v1340
    %v1346 = vadd.s32 %v1341, %v1345
    %v1347 = vadd.s32 %v1346, 536870912
    %v1348 = vshrl.u32 %v1347, 30
    %v1349 = vshll.u32 %v1348, 30
    %v1350 = vsub.s32 %v1346, %v1349
    %vm1351 = vcmp.lt.s32.totalorder %v1350, 0
    %v1352 = vsub.s32 0, %v1350
    %v1353 = vsel %vm1351, %v1352, %v1350
    %v1354 = vclz %v1353
    %v1355 = vsub.s32 %v1354, 2
    %vm1356 = vcmp.gt.s32.totalorder 0, %v1355
    %v1357 = vsel %vm1356, 0, %v1355
    %v1358 = vsub.s32 32, %v1357
    %v1359 = vshll.u32 %v1350, %v1357
    %v1360 = vshrl.u32 %v1342, %v1358
    %v1361 = vor.u32 %v1359, %v1360
    %v1362 = vsub.s32 4294967266, %v1357
    %v1363 = vadd.s32 %v1362, 127
    %v1364 = vshll.u32 %v1363, 23
    %v1365 = vor.u32 4788187, %v1364
    %v1366 = vand.u32 2147483647, %v1365
    %v1368 = vcvt.s32.f32 %v1361
    %v1369 = vmul.f32 %v1368, %v1366
    %v1370 = vxor.u32 %v1369, 2147483648
    %v1371 = vsel %vm1288, %v1370, %v1369
    %v1372 = vsub.s32 4, %v1348
    %v1373 = vsel %vm1288, %v1372, %v1348
    %v1374 = vsel %vm1287, %v605, %v1371
    %v1375 = vsel %vm1287, 0, %v1373
    %v1376 = vcosq.f32.pop %v1374
    %v1377 = vsinq.f32.pop %v1374
    %vm1378 = vweird.f32 %v605
    %v1379 = vadd.s32 %v1375, 3
    %v1380 = vand.u32 %v1379, 3
    %vm1381 = vcmp.lt.s32.totalorder %v1380, 2
    %vm1382 = vcmp.eq.s32.totalorder %v1380, 0
    %v1383 = vxor.u32 %v1377, 2147483648
    %v1384 = vsel %vm1382, %v1376, %v1383
    %vm1385 = vcmp.eq.s32.totalorder %v1380, 2
    %v1386 = vxor.u32 %v1376, 2147483648
    %v1387 = vsel %vm1385, %v1386, %v1377
    %v1388 = vsel %vm1381, %v1384, %v1387
    %v1389 = vsel %vm1378, nan, %v1388
    %v1390 = vand.u32 2147483647, %v1169
    %vm1391 = vcmp.le.f32.partialorder %v1390, 0.7853982
    %vm1392 = vcmp.lt.s32.totalorder %v1169, 0
    %v1393 = vand.u32 %v1169, 2139095040
    %v1394 = vshrl.u32 %v1393, 23
    %v1395 = vsub.s32 %v1394, 127
    %v1396 = vand.u32 2147483647, %v1169
    %v1397 = vand.u32 %v1396, 8388607
    %v1398 = vor.u32 %v1397, 8388608
    %v1399 = vsub.s32 0, %v1398
    %v1400 = vadd.s32 %v1395, 1
    %vm1401 = vcmp.gt.s32.totalorder %v1400, 0
    %v1402 = vsel %vm1401, %v1400, 0
    %v1403 = vshrl.u32 %v1402, 5
    %v1404 = vand.u32 %v1402, 31
    %v1405 = vsub.s32 32, %v1404
    %v1406 = vshrl.u32 683565275, %v1405
    %v1407 = vshll.u32 683565275, %v1404
    %v1408 = vshrl.u32 2475754826, %v1405
    %v1409 = vor.u32 %v1407, %v1408
    %v1410 = vshll.u32 2475754826, %v1404
    %v1411 = vshrl.u32 2131351028, %v1405
    %v1412 = vor.u32 %v1410, %v1411
    %v1413 = vshll.u32 2131351028, %v1404
    %v1414 = vshrl.u32 2102212464, %v1405
    %v1415 = vor.u32 %v1413, %v1414
    %v1416 = vshll.u32 2102212464, %v1404
    %v1417 = vshrl.u32 920167782, %v1405
    %v1418 = vor.u32 %v1416, %v1417
    %v1419 = vshll.u32 920167782, %v1404
    %v1420 = vshrl.u32 1326507024, %v1405
    %v1421 = vor.u32 %v1419, %v1420
    %vm1422 = vcmp.lt.s32.totalorder %v1403, 1
    %vm1423 = vcmp.lt.s32.totalorder %v1403, 2
    %vm1424 = vcmp.lt.s32.totalorder %v1403, 3
    %vm1425 = vcmp.lt.s32.totalorder %v1403, 4
    %v1426 = vsel %vm1422, %v1406, %v1409
    %v1427 = vsel %vm1425, %v1415, 2102212464
    %v1428 = vsel %vm1424, %v1412, %v1427
    %v1429 = vsel %vm1423, %v1426, %v1428
    %v1430 = vsel %vm1422, %v1409, %v1412
    %v1431 = vsel %vm1425, %v1418, 920167782
    %v1432 = vsel %vm1424, %v1415, %v1431
    %v1433 = vsel %vm1423, %v1430, %v1432
    %v1434 = vsel %vm1422, %v1412, %v1415
    %v1435 = vsel %vm1425, %v1421, 1326507024
    %v1436 = vsel %vm1424, %v1418, %v1435
    %v1437 = vsel %vm1423, %v1434, %v1436
    %v1438 = vshll.u32 %v1398, 8
    %v1439 = vmul.u32.u64.compose %v1438, %v1437
    %v1440 = vextract.low.u32 %v1439
    %v1441 = vextract.high.u32 %v1439
    %v1442 = vmul.u32.u64.compose %v1438, %v1433
    %v1443 = vextract.low.u32 %v1442
    %v1444 = vextract.high.u32 %v1442
    %v1445 = vmul.u32 %v1438, %v1429
    %v1446 = vadd.s32 %v1441, %v1443
    %vm1447 = vc.u32 %v1441, %v1443
    %v1448 = vadd.s32 %v1444, 1
    %v1449 = vsel %vm1447, %v1448, %v1444
    %v1450 = vadd.s32 %v1445, %v1449
    %v1451 = vadd.s32 %v1450, 536870912
    %v1452 = vshrl.u32 %v1451, 30
    %v1453 = vshll.u32 %v1452, 30
    %v1454 = vsub.s32 %v1450, %v1453
    %vm1455 = vcmp.lt.s32.totalorder %v1454, 0
    %v1456 = vsub.s32 0, %v1454
    %v1457 = vsel %vm1455, %v1456, %v1454
    %v1458 = vclz %v1457
    %v1459 = vsub.s32 %v1458, 2
    %vm1460 = vcmp.gt.s32.totalorder 0, %v1459
    %v1461 = vsel %vm1460, 0, %v1459
    %v1462 = vsub.s32 32, %v1461
    %v1463 = vshll.u32 %v1454, %v1461
    %v1464 = vshrl.u32 %v1446, %v1462
    %v1465 = vor.u32 %v1463, %v1464
    %v1466 = vsub.s32 4294967266, %v1461
    %v1467 = vadd.s32 %v1466, 127
    %v1468 = vshll.u32 %v1467, 23
    %v1469 = vor.u32 4788187, %v1468
    %v1470 = vand.u32 2147483647, %v1469
    %v1472 = vcvt.s32.f32 %v1465
    %v1473 = vmul.f32 %v1472, %v1470
    %v1474 = vxor.u32 %v1473, 2147483648
    %v1475 = vsel %vm1392, %v1474, %v1473
    %v1476 = vsub.s32 4, %v1452
    %v1477 = vsel %vm1392, %v1476, %v1452
    %v1478 = vsel %vm1391, %v1169, %v1475
    %v1479 = vsel %vm1391, 0, %v1477
    %v1480 = vcosq.f32.pop %v1478
    %v1481 = vsinq.f32.pop %v1478
    %vm1482 = vweird.f32 %v1169
    %v1483 = vadd.s32 %v1479, 3
    %v1484 = vand.u32 %v1483, 3
    %vm1485 = vcmp.lt.s32.totalorder %v1484, 2
    %vm1486 = vcmp.eq.s32.totalorder %v1484, 0
    %v1487 = vxor.u32 %v1481, 2147483648
    %v1488 = vsel %vm1486, %v1480, %v1487
    %vm1489 = vcmp.eq.s32.totalorder %v1484, 2
    %v1490 = vxor.u32 %v1480, 2147483648
    %v1491 = vsel %vm1489, %v1490, %v1481
    %v1492 = vsel %vm1485, %v1488, %v1491
    %v1493 = vsel %vm1482, nan, %v1492
    %v1494 = vand.u32 2147483647, %v1171
    %vm1495 = vcmp.le.f32.partialorder %v1494, 0.7853982
    %vm1496 = vcmp.lt.s32.totalorder %v1171, 0
    %v1497 = vand.u32 %v1171, 2139095040
    %v1498 = vshrl.u32 %v1497, 23
    %v1499 = vsub.s32 %v1498, 127
    %v1500 = vand.u32 2147483647, %v1171
    %v1501 = vand.u32 %v1500, 8388607
    %v1502 = vor.u32 %v1501, 8388608
    %v1503 = vsub.s32 0, %v1502
    %v1504 = vadd.s32 %v1499, 1
    %vm1505 = vcmp.gt.s32.totalorder %v1504, 0
    %v1506 = vsel %vm1505, %v1504, 0
    %v1507 = vshrl.u32 %v1506, 5
    %v1508 = vand.u32 %v1506, 31
    %v1509 = vsub.s32 32, %v1508
    %v1510 = vshrl.u32 683565275, %v1509
    %v1511 = vshll.u32 683565275, %v1508
    %v1512 = vshrl.u32 2475754826, %v1509
    %v1513 = vor.u32 %v1511, %v1512
    %v1514 = vshll.u32 2475754826, %v1508
    %v1515 = vshrl.u32 2131351028, %v1509
    %v1516 = vor.u32 %v1514, %v1515
    %v1517 = vshll.u32 2131351028, %v1508
    %v1518 = vshrl.u32 2102212464, %v1509
    %v1519 = vor.u32 %v1517, %v1518
    %v1520 = vshll.u32 2102212464, %v1508
    %v1521 = vshrl.u32 920167782, %v1509
    %v1522 = vor.u32 %v1520, %v1521
    %v1523 = vshll.u32 920167782, %v1508
    %v1524 = vshrl.u32 1326507024, %v1509
    %v1525 = vor.u32 %v1523, %v1524
    %vm1526 = vcmp.lt.s32.totalorder %v1507, 1
    %vm1527 = vcmp.lt.s32.totalorder %v1507, 2
    %vm1528 = vcmp.lt.s32.totalorder %v1507, 3
    %vm1529 = vcmp.lt.s32.totalorder %v1507, 4
    %v1530 = vsel %vm1526, %v1510, %v1513
    %v1531 = vsel %vm1529, %v1519, 2102212464
    %v1532 = vsel %vm1528, %v1516, %v1531
    %v1533 = vsel %vm1527, %v1530, %v1532
    %v1534 = vsel %vm1526, %v1513, %v1516
    %v1535 = vsel %vm1529, %v1522, 920167782
    %v1536 = vsel %vm1528, %v1519, %v1535
    %v1537 = vsel %vm1527, %v1534, %v1536
    %v1538 = vsel %vm1526, %v1516, %v1519
    %v1539 = vsel %vm1529, %v1525, 1326507024
    %v1540 = vsel %vm1528, %v1522, %v1539
    %v1541 = vsel %vm1527, %v1538, %v1540
    %v1542 = vshll.u32 %v1502, 8
    %v1543 = vmul.u32.u64.compose %v1542, %v1541
    %v1544 = vextract.low.u32 %v1543
    %v1545 = vextract.high.u32 %v1543
    %v1546 = vmul.u32.u64.compose %v1542, %v1537
    %v1547 = vextract.low.u32 %v1546
    %v1548 = vextract.high.u32 %v1546
    %v1549 = vmul.u32 %v1542, %v1533
    %v1550 = vadd.s32 %v1545, %v1547
    %vm1551 = vc.u32 %v1545, %v1547
    %v1552 = vadd.s32 %v1548, 1
    %v1553 = vsel %vm1551, %v1552, %v1548
    %v1554 = vadd.s32 %v1549, %v1553
    %v1555 = vadd.s32 %v1554, 536870912
    %v1556 = vshrl.u32 %v1555, 30
    %v1557 = vshll.u32 %v1556, 30
    %v1558 = vsub.s32 %v1554, %v1557
    %vm1559 = vcmp.lt.s32.totalorder %v1558, 0
    %v1560 = vsub.s32 0, %v1558
    %v1561 = vsel %vm1559, %v1560, %v1558
    %v1562 = vclz %v1561
    %v1563 = vsub.s32 %v1562, 2
    %vm1564 = vcmp.gt.s32.totalorder 0, %v1563
    %v1565 = vsel %vm1564, 0, %v1563
    %v1566 = vsub.s32 32, %v1565
    %v1567 = vshll.u32 %v1558, %v1565
    %v1568 = vshrl.u32 %v1550, %v1566
    %v1569 = vor.u32 %v1567, %v1568
    %v1570 = vsub.s32 4294967266, %v1565
    %v1571 = vadd.s32 %v1570, 127
    %v1572 = vshll.u32 %v1571, 23
    %v1573 = vor.u32 4788187, %v1572
    %v1574 = vand.u32 2147483647, %v1573
    %v1576 = vcvt.s32.f32 %v1569
    %v1577 = vmul.f32 %v1576, %v1574
    %v1578 = vxor.u32 %v1577, 2147483648
    %v1579 = vsel %vm1496, %v1578, %v1577
    %v1580 = vsub.s32 4, %v1556
    %v1581 = vsel %vm1496, %v1580, %v1556
    %v1582 = vsel %vm1495, %v1171, %v1579
    %v1583 = vsel %vm1495, 0, %v1581
    %v1584 = vcosq.f32.pop %v1582
    %v1585 = vsinq.f32.pop %v1582
    %vm1586 = vweird.f32 %v1171
    %v1587 = vadd.s32 %v1583, 3
    %v1588 = vand.u32 %v1587, 3
    %vm1589 = vcmp.lt.s32.totalorder %v1588, 2
    %vm1590 = vcmp.eq.s32.totalorder %v1588, 0
    %v1591 = vxor.u32 %v1585, 2147483648
    %v1592 = vsel %vm1590, %v1584, %v1591
    %vm1593 = vcmp.eq.s32.totalorder %v1588, 2
    %v1594 = vxor.u32 %v1584, 2147483648
    %v1595 = vsel %vm1593, %v1594, %v1585
    %v1596 = vsel %vm1589, %v1592, %v1595
    %v1597 = vsel %vm1586, nan, %v1596
    %v1598 = vand.u32 2147483647, %v610
    %vm1599 = vcmp.le.f32.partialorder %v1598, 0.7853982
    %vm1600 = vcmp.lt.s32.totalorder %v610, 0
    %v1601 = vand.u32 %v610, 2139095040
    %v1602 = vshrl.u32 %v1601, 23
    %v1603 = vsub.s32 %v1602, 127
    %v1604 = vand.u32 2147483647, %v610
    %v1605 = vand.u32 %v1604, 8388607
    %v1606 = vor.u32 %v1605, 8388608
    %v1607 = vsub.s32 0, %v1606
    %v1608 = vadd.s32 %v1603, 1
    %vm1609 = vcmp.gt.s32.totalorder %v1608, 0
    %v1610 = vsel %vm1609, %v1608, 0
    %v1611 = vshrl.u32 %v1610, 5
    %v1612 = vand.u32 %v1610, 31
    %v1613 = vsub.s32 32, %v1612
    %v1614 = vshrl.u32 683565275, %v1613
    %v1615 = vshll.u32 683565275, %v1612
    %v1616 = vshrl.u32 2475754826, %v1613
    %v1617 = vor.u32 %v1615, %v1616
    %v1618 = vshll.u32 2475754826, %v1612
    %v1619 = vshrl.u32 2131351028, %v1613
    %v1620 = vor.u32 %v1618, %v1619
    %v1621 = vshll.u32 2131351028, %v1612
    %v1622 = vshrl.u32 2102212464, %v1613
    %v1623 = vor.u32 %v1621, %v1622
    %v1624 = vshll.u32 2102212464, %v1612
    %v1625 = vshrl.u32 920167782, %v1613
    %v1626 = vor.u32 %v1624, %v1625
    %v1627 = vshll.u32 920167782, %v1612
    %v1628 = vshrl.u32 1326507024, %v1613
    %v1629 = vor.u32 %v1627, %v1628
    %vm1630 = vcmp.lt.s32.totalorder %v1611, 1
    %vm1631 = vcmp.lt.s32.totalorder %v1611, 2
    %vm1632 = vcmp.lt.s32.totalorder %v1611, 3
    %vm1633 = vcmp.lt.s32.totalorder %v1611, 4
    %v1634 = vsel %vm1630, %v1614, %v1617
    %v1635 = vsel %vm1633, %v1623, 2102212464
    %v1636 = vsel %vm1632, %v1620, %v1635
    %v1637 = vsel %vm1631, %v1634, %v1636
    %v1638 = vsel %vm1630, %v1617, %v1620
    %v1639 = vsel %vm1633, %v1626, 920167782
    %v1640 = vsel %vm1632, %v1623, %v1639
    %v1641 = vsel %vm1631, %v1638, %v1640
    %v1642 = vsel %vm1630, %v1620, %v1623
    %v1643 = vsel %vm1633, %v1629, 1326507024
    %v1644 = vsel %vm1632, %v1626, %v1643
    %v1645 = vsel %vm1631, %v1642, %v1644
    %v1646 = vshll.u32 %v1606, 8
    %v1647 = vmul.u32.u64.compose %v1646, %v1645
    %v1648 = vextract.low.u32 %v1647
    %v1649 = vextract.high.u32 %v1647
    %v1650 = vmul.u32.u64.compose %v1646, %v1641
    %v1651 = vextract.low.u32 %v1650
    %v1652 = vextract.high.u32 %v1650
    %v1653 = vmul.u32 %v1646, %v1637
    %v1654 = vadd.s32 %v1649, %v1651
    %vm1655 = vc.u32 %v1649, %v1651
    %v1656 = vadd.s32 %v1652, 1
    %v1657 = vsel %vm1655, %v1656, %v1652
    %v1658 = vadd.s32 %v1653, %v1657
    %v1659 = vadd.s32 %v1658, 536870912
    %v1660 = vshrl.u32 %v1659, 30
    %v1661 = vshll.u32 %v1660, 30
    %v1662 = vsub.s32 %v1658, %v1661
    %vm1663 = vcmp.lt.s32.totalorder %v1662, 0
    %v1664 = vsub.s32 0, %v1662
    %v1665 = vsel %vm1663, %v1664, %v1662
    %v1666 = vclz %v1665
    %v1667 = vsub.s32 %v1666, 2
    %vm1668 = vcmp.gt.s32.totalorder 0, %v1667
    %v1669 = vsel %vm1668, 0, %v1667
    %v1670 = vsub.s32 32, %v1669
    %v1671 = vshll.u32 %v1662, %v1669
    %v1672 = vshrl.u32 %v1654, %v1670
    %v1673 = vor.u32 %v1671, %v1672
    %v1674 = vsub.s32 4294967266, %v1669
    %v1675 = vadd.s32 %v1674, 127
    %v1676 = vshll.u32 %v1675, 23
    %v1677 = vor.u32 4788187, %v1676
    %v1678 = vand.u32 2147483647, %v1677
    %v1680 = vcvt.s32.f32 %v1673
    %v1681 = vmul.f32 %v1680, %v1678
    %v1682 = vxor.u32 %v1681, 2147483648
    %v1683 = vsel %vm1600, %v1682, %v1681
    %v1684 = vsub.s32 4, %v1660
    %v1685 = vsel %vm1600, %v1684, %v1660
    %v1686 = vsel %vm1599, %v610, %v1683
    %v1687 = vsel %vm1599, 0, %v1685
    %v1688 = vcosq.f32.pop %v1686
    %v1689 = vsinq.f32.pop %v1686
    %vm1690 = vweird.f32 %v610
    %v1691 = vadd.s32 %v1687, 3
    %v1692 = vand.u32 %v1691, 3
    %vm1693 = vcmp.lt.s32.totalorder %v1692, 2
    %vm1694 = vcmp.eq.s32.totalorder %v1692, 0
    %v1695 = vxor.u32 %v1689, 2147483648
    %v1696 = vsel %vm1694, %v1688, %v1695
    %vm1697 = vcmp.eq.s32.totalorder %v1692, 2
    %v1698 = vxor.u32 %v1688, 2147483648
    %v1699 = vsel %vm1697, %v1698, %v1689
    %v1700 = vsel %vm1693, %v1696, %v1699
    %v1701 = vsel %vm1690, nan, %v1700
    %v1702 = vand.u32 2147483647, %v612
    %vm1703 = vcmp.le.f32.partialorder %v1702, 0.7853982
    %vm1704 = vcmp.lt.s32.totalorder %v612, 0
    %v1705 = vand.u32 %v612, 2139095040
    %v1706 = vshrl.u32 %v1705, 23
    %v1707 = vsub.s32 %v1706, 127
    %v1708 = vand.u32 2147483647, %v612
    %v1709 = vand.u32 %v1708, 8388607
    %v1710 = vor.u32 %v1709, 8388608
    %v1711 = vsub.s32 0, %v1710
    %v1712 = vadd.s32 %v1707, 1
    %vm1713 = vcmp.gt.s32.totalorder %v1712, 0
    %v1714 = vsel %vm1713, %v1712, 0
    %v1715 = vshrl.u32 %v1714, 5
    %v1716 = vand.u32 %v1714, 31
    %v1717 = vsub.s32 32, %v1716
    %v1718 = vshrl.u32 683565275, %v1717
    %v1719 = vshll.u32 683565275, %v1716
    %v1720 = vshrl.u32 2475754826, %v1717
    %v1721 = vor.u32 %v1719, %v1720
    %v1722 = vshll.u32 2475754826, %v1716
    %v1723 = vshrl.u32 2131351028, %v1717
    %v1724 = vor.u32 %v1722, %v1723
    %v1725 = vshll.u32 2131351028, %v1716
    %v1726 = vshrl.u32 2102212464, %v1717
    %v1727 = vor.u32 %v1725, %v1726
    %v1728 = vshll.u32 2102212464, %v1716
    %v1729 = vshrl.u32 920167782, %v1717
    %v1730 = vor.u32 %v1728, %v1729
    %v1731 = vshll.u32 920167782, %v1716
    %v1732 = vshrl.u32 1326507024, %v1717
    %v1733 = vor.u32 %v1731, %v1732
    %vm1734 = vcmp.lt.s32.totalorder %v1715, 1
    %vm1735 = vcmp.lt.s32.totalorder %v1715, 2
    %vm1736 = vcmp.lt.s32.totalorder %v1715, 3
    %vm1737 = vcmp.lt.s32.totalorder %v1715, 4
    %v1738 = vsel %vm1734, %v1718, %v1721
    %v1739 = vsel %vm1737, %v1727, 2102212464
    %v1740 = vsel %vm1736, %v1724, %v1739
    %v1741 = vsel %vm1735, %v1738, %v1740
    %v1742 = vsel %vm1734, %v1721, %v1724
    %v1743 = vsel %vm1737, %v1730, 920167782
    %v1744 = vsel %vm1736, %v1727, %v1743
    %v1745 = vsel %vm1735, %v1742, %v1744
    %v1746 = vsel %vm1734, %v1724, %v1727
    %v1747 = vsel %vm1737, %v1733, 1326507024
    %v1748 = vsel %vm1736, %v1730, %v1747
    %v1749 = vsel %vm1735, %v1746, %v1748
    %v1750 = vshll.u32 %v1710, 8
    %v1751 = vmul.u32.u64.compose %v1750, %v1749
    %v1752 = vextract.low.u32 %v1751
    %v1753 = vextract.high.u32 %v1751
    %v1754 = vmul.u32.u64.compose %v1750, %v1745
    %v1755 = vextract.low.u32 %v1754
    %v1756 = vextract.high.u32 %v1754
    %v1757 = vmul.u32 %v1750, %v1741
    %v1758 = vadd.s32 %v1753, %v1755
    %vm1759 = vc.u32 %v1753, %v1755
    %v1760 = vadd.s32 %v1756, 1
    %v1761 = vsel %vm1759, %v1760, %v1756
    %v1762 = vadd.s32 %v1757, %v1761
    %v1763 = vadd.s32 %v1762, 536870912
    %v1764 = vshrl.u32 %v1763, 30
    %v1765 = vshll.u32 %v1764, 30
    %v1766 = vsub.s32 %v1762, %v1765
    %vm1767 = vcmp.lt.s32.totalorder %v1766, 0
    %v1768 = vsub.s32 0, %v1766
    %v1769 = vsel %vm1767, %v1768, %v1766
    %v1770 = vclz %v1769
    %v1771 = vsub.s32 %v1770, 2
    %vm1772 = vcmp.gt.s32.totalorder 0, %v1771
    %v1773 = vsel %vm1772, 0, %v1771
    %v1774 = vsub.s32 32, %v1773
    %v1775 = vshll.u32 %v1766, %v1773
    %v1776 = vshrl.u32 %v1758, %v1774
    %v1777 = vor.u32 %v1775, %v1776
    %v1778 = vsub.s32 4294967266, %v1773
    %v1779 = vadd.s32 %v1778, 127
    %v1780 = vshll.u32 %v1779, 23
    %v1781 = vor.u32 4788187, %v1780
    %v1782 = vand.u32 2147483647, %v1781
    %v1784 = vcvt.s32.f32 %v1777
    %v1785 = vmul.f32 %v1784, %v1782
    %v1786 = vxor.u32 %v1785, 2147483648
    %v1787 = vsel %vm1704, %v1786, %v1785
    %v1788 = vsub.s32 4, %v1764
    %v1789 = vsel %vm1704, %v1788, %v1764
    %v1790 = vsel %vm1703, %v612, %v1787
    %v1791 = vsel %vm1703, 0, %v1789
    %v1792 = vcosq.f32.pop %v1790
    %v1793 = vsinq.f32.pop %v1790
    %vm1794 = vweird.f32 %v612
    %v1795 = vadd.s32 %v1791, 3
    %v1796 = vand.u32 %v1795, 3
    %vm1797 = vcmp.lt.s32.totalorder %v1796, 2
    %vm1798 = vcmp.eq.s32.totalorder %v1796, 0
    %v1799 = vxor.u32 %v1793, 2147483648
    %v1800 = vsel %vm1798, %v1792, %v1799
    %vm1801 = vcmp.eq.s32.totalorder %v1796, 2
    %v1802 = vxor.u32 %v1792, 2147483648
    %v1803 = vsel %vm1801, %v1802, %v1793
    %v1804 = vsel %vm1797, %v1800, %v1803
    %v1805 = vsel %vm1794, nan, %v1804
    %v1806 = vand.u32 2147483647, %v1176
    %vm1807 = vcmp.le.f32.partialorder %v1806, 0.7853982
    %vm1808 = vcmp.lt.s32.totalorder %v1176, 0
    %v1809 = vand.u32 %v1176, 2139095040
    %v1810 = vshrl.u32 %v1809, 23
    %v1811 = vsub.s32 %v1810, 127
    %v1812 = vand.u32 2147483647, %v1176
    %v1813 = vand.u32 %v1812, 8388607
    %v1814 = vor.u32 %v1813, 8388608
    %v1815 = vsub.s32 0, %v1814
    %v1816 = vadd.s32 %v1811, 1
    %vm1817 = vcmp.gt.s32.totalorder %v1816, 0
    %v1818 = vsel %vm1817, %v1816, 0
    %v1819 = vshrl.u32 %v1818, 5
    %v1820 = vand.u32 %v1818, 31
    %v1821 = vsub.s32 32, %v1820
    %v1822 = vshrl.u32 683565275, %v1821
    %v1823 = vshll.u32 683565275, %v1820
    %v1824 = vshrl.u32 2475754826, %v1821
    %v1825 = vor.u32 %v1823, %v1824
    %v1826 = vshll.u32 2475754826, %v1820
    %v1827 = vshrl.u32 2131351028, %v1821
    %v1828 = vor.u32 %v1826, %v1827
    %v1829 = vshll.u32 2131351028, %v1820
    %v1830 = vshrl.u32 2102212464, %v1821
    %v1831 = vor.u32 %v1829, %v1830
    %v1832 = vshll.u32 2102212464, %v1820
    %v1833 = vshrl.u32 920167782, %v1821
    %v1834 = vor.u32 %v1832, %v1833
    %v1835 = vshll.u32 920167782, %v1820
    %v1836 = vshrl.u32 1326507024, %v1821
    %v1837 = vor.u32 %v1835, %v1836
    %vm1838 = vcmp.lt.s32.totalorder %v1819, 1
    %vm1839 = vcmp.lt.s32.totalorder %v1819, 2
    %vm1840 = vcmp.lt.s32.totalorder %v1819, 3
    %vm1841 = vcmp.lt.s32.totalorder %v1819, 4
    %v1842 = vsel %vm1838, %v1822, %v1825
    %v1843 = vsel %vm1841, %v1831, 2102212464
    %v1844 = vsel %vm1840, %v1828, %v1843
    %v1845 = vsel %vm1839, %v1842, %v1844
    %v1846 = vsel %vm1838, %v1825, %v1828
    %v1847 = vsel %vm1841, %v1834, 920167782
    %v1848 = vsel %vm1840, %v1831, %v1847
    %v1849 = vsel %vm1839, %v1846, %v1848
    %v1850 = vsel %vm1838, %v1828, %v1831
    %v1851 = vsel %vm1841, %v1837, 1326507024
    %v1852 = vsel %vm1840, %v1834, %v1851
    %v1853 = vsel %vm1839, %v1850, %v1852
    %v1854 = vshll.u32 %v1814, 8
    %v1855 = vmul.u32.u64.compose %v1854, %v1853
    %v1856 = vextract.low.u32 %v1855
    %v1857 = vextract.high.u32 %v1855
    %v1858 = vmul.u32.u64.compose %v1854, %v1849
    %v1859 = vextract.low.u32 %v1858
    %v1860 = vextract.high.u32 %v1858
    %v1861 = vmul.u32 %v1854, %v1845
    %v1862 = vadd.s32 %v1857, %v1859
    %vm1863 = vc.u32 %v1857, %v1859
    %v1864 = vadd.s32 %v1860, 1
    %v1865 = vsel %vm1863, %v1864, %v1860
    %v1866 = vadd.s32 %v1861, %v1865
    %v1867 = vadd.s32 %v1866, 536870912
    %v1868 = vshrl.u32 %v1867, 30
    %v1869 = vshll.u32 %v1868, 30
    %v1870 = vsub.s32 %v1866, %v1869
    %vm1871 = vcmp.lt.s32.totalorder %v1870, 0
    %v1872 = vsub.s32 0, %v1870
    %v1873 = vsel %vm1871, %v1872, %v1870
    %v1874 = vclz %v1873
    %v1875 = vsub.s32 %v1874, 2
    %vm1876 = vcmp.gt.s32.totalorder 0, %v1875
    %v1877 = vsel %vm1876, 0, %v1875
    %v1878 = vsub.s32 32, %v1877
    %v1879 = vshll.u32 %v1870, %v1877
    %v1880 = vshrl.u32 %v1862, %v1878
    %v1881 = vor.u32 %v1879, %v1880
    %v1882 = vsub.s32 4294967266, %v1877
    %v1883 = vadd.s32 %v1882, 127
    %v1884 = vshll.u32 %v1883, 23
    %v1885 = vor.u32 4788187, %v1884
    %v1886 = vand.u32 2147483647, %v1885
    %v1888 = vcvt.s32.f32 %v1881
    %v1889 = vmul.f32 %v1888, %v1886
    %v1890 = vxor.u32 %v1889, 2147483648
    %v1891 = vsel %vm1808, %v1890, %v1889
    %v1892 = vsub.s32 4, %v1868
    %v1893 = vsel %vm1808, %v1892, %v1868
    %v1894 = vsel %vm1807, %v1176, %v1891
    %v1895 = vsel %vm1807, 0, %v1893
    %v1896 = vcosq.f32.pop %v1894
    %v1897 = vsinq.f32.pop %v1894
    %vm1898 = vweird.f32 %v1176
    %v1899 = vadd.s32 %v1895, 3
    %v1900 = vand.u32 %v1899, 3
    %vm1901 = vcmp.lt.s32.totalorder %v1900, 2
    %vm1902 = vcmp.eq.s32.totalorder %v1900, 0
    %v1903 = vxor.u32 %v1897, 2147483648
    %v1904 = vsel %vm1902, %v1896, %v1903
    %vm1905 = vcmp.eq.s32.totalorder %v1900, 2
    %v1906 = vxor.u32 %v1896, 2147483648
    %v1907 = vsel %vm1905, %v1906, %v1897
    %v1908 = vsel %vm1901, %v1904, %v1907
    %v1909 = vsel %vm1898, nan, %v1908
    %v1910 = vand.u32 2147483647, %v1178
    %vm1911 = vcmp.le.f32.partialorder %v1910, 0.7853982
    %vm1912 = vcmp.lt.s32.totalorder %v1178, 0
    %v1913 = vand.u32 %v1178, 2139095040
    %v1914 = vshrl.u32 %v1913, 23
    %v1915 = vsub.s32 %v1914, 127
    %v1916 = vand.u32 2147483647, %v1178
    %v1917 = vand.u32 %v1916, 8388607
    %v1918 = vor.u32 %v1917, 8388608
    %v1919 = vsub.s32 0, %v1918
    %v1920 = vadd.s32 %v1915, 1
    %vm1921 = vcmp.gt.s32.totalorder %v1920, 0
    %v1922 = vsel %vm1921, %v1920, 0
    %v1923 = vshrl.u32 %v1922, 5
    %v1924 = vand.u32 %v1922, 31
    %v1925 = vsub.s32 32, %v1924
    %v1926 = vshrl.u32 683565275, %v1925
    %v1927 = vshll.u32 683565275, %v1924
    %v1928 = vshrl.u32 2475754826, %v1925
    %v1929 = vor.u32 %v1927, %v1928
    %v1930 = vshll.u32 2475754826, %v1924
    %v1931 = vshrl.u32 2131351028, %v1925
    %v1932 = vor.u32 %v1930, %v1931
    %v1933 = vshll.u32 2131351028, %v1924
    %v1934 = vshrl.u32 2102212464, %v1925
    %v1935 = vor.u32 %v1933, %v1934
    %v1936 = vshll.u32 2102212464, %v1924
    %v1937 = vshrl.u32 920167782, %v1925
    %v1938 = vor.u32 %v1936, %v1937
    %v1939 = vshll.u32 920167782, %v1924
    %v1940 = vshrl.u32 1326507024, %v1925
    %v1941 = vor.u32 %v1939, %v1940
    %vm1942 = vcmp.lt.s32.totalorder %v1923, 1
    %vm1943 = vcmp.lt.s32.totalorder %v1923, 2
    %vm1944 = vcmp.lt.s32.totalorder %v1923, 3
    %vm1945 = vcmp.lt.s32.totalorder %v1923, 4
    %v1946 = vsel %vm1942, %v1926, %v1929
    %v1947 = vsel %vm1945, %v1935, 2102212464
    %v1948 = vsel %vm1944, %v1932, %v1947
    %v1949 = vsel %vm1943, %v1946, %v1948
    %v1950 = vsel %vm1942, %v1929, %v1932
    %v1951 = vsel %vm1945, %v1938, 920167782
    %v1952 = vsel %vm1944, %v1935, %v1951
    %v1953 = vsel %vm1943, %v1950, %v1952
    %v1954 = vsel %vm1942, %v1932, %v1935
    %v1955 = vsel %vm1945, %v1941, 1326507024
    %v1956 = vsel %vm1944, %v1938, %v1955
    %v1957 = vsel %vm1943, %v1954, %v1956
    %v1958 = vshll.u32 %v1918, 8
    %v1959 = vmul.u32.u64.compose %v1958, %v1957
    %v1960 = vextract.low.u32 %v1959
    %v1961 = vextract.high.u32 %v1959
    %v1962 = vmul.u32.u64.compose %v1958, %v1953
    %v1963 = vextract.low.u32 %v1962
    %v1964 = vextract.high.u32 %v1962
    %v1965 = vmul.u32 %v1958, %v1949
    %v1966 = vadd.s32 %v1961, %v1963
    %vm1967 = vc.u32 %v1961, %v1963
    %v1968 = vadd.s32 %v1964, 1
    %v1969 = vsel %vm1967, %v1968, %v1964
    %v1970 = vadd.s32 %v1965, %v1969
    %v1971 = vadd.s32 %v1970, 536870912
    %v1972 = vshrl.u32 %v1971, 30
    %v1973 = vshll.u32 %v1972, 30
    %v1974 = vsub.s32 %v1970, %v1973
    %vm1975 = vcmp.lt.s32.totalorder %v1974, 0
    %v1976 = vsub.s32 0, %v1974
    %v1977 = vsel %vm1975, %v1976, %v1974
    %v1978 = vclz %v1977
    %v1979 = vsub.s32 %v1978, 2
    %vm1980 = vcmp.gt.s32.totalorder 0, %v1979
    %v1981 = vsel %vm1980, 0, %v1979
    %v1982 = vsub.s32 32, %v1981
    %v1983 = vshll.u32 %v1974, %v1981
    %v1984 = vshrl.u32 %v1966, %v1982
    %v1985 = vor.u32 %v1983, %v1984
    %v1986 = vsub.s32 4294967266, %v1981
    %v1987 = vadd.s32 %v1986, 127
    %v1988 = vshll.u32 %v1987, 23
    %v1989 = vor.u32 4788187, %v1988
    %v1990 = vand.u32 2147483647, %v1989
    %v1992 = vcvt.s32.f32 %v1985
    %v1993 = vmul.f32 %v1992, %v1990
    %v1994 = vxor.u32 %v1993, 2147483648
    %v1995 = vsel %vm1912, %v1994, %v1993
    %v1996 = vsub.s32 4, %v1972
    %v1997 = vsel %vm1912, %v1996, %v1972
    %v1998 = vsel %vm1911, %v1178, %v1995
    %v1999 = vsel %vm1911, 0, %v1997
    %v2000 = vcosq.f32.pop %v1998
    %v2001 = vsinq.f32.pop %v1998
    %vm2002 = vweird.f32 %v1178
    %v2003 = vadd.s32 %v1999, 3
    %v2004 = vand.u32 %v2003, 3
    %vm2005 = vcmp.lt.s32.totalorder %v2004, 2
    %vm2006 = vcmp.eq.s32.totalorder %v2004, 0
    %v2007 = vxor.u32 %v2001, 2147483648
    %v2008 = vsel %vm2006, %v2000, %v2007
    %vm2009 = vcmp.eq.s32.totalorder %v2004, 2
    %v2010 = vxor.u32 %v2000, 2147483648
    %v2011 = vsel %vm2009, %v2010, %v2001
    %v2012 = vsel %vm2005, %v2008, %v2011
    %v2013 = vsel %vm2002, nan, %v2012
    %v2014 = vsel %vm1181, 1, 0
    %v2015 = vlaneseq
    %v2016 = vshrl.u32 %v2015, 7
    %v2017 = vsub.s32 0, %v2016
    %v2018 = vrot.slane %v2014, %v2017
    %v2019 = vlaneseq
    %v2020 = vshrl.u32 %v2019, 7
    %v2021 = vsub.s32 1, %v2020
    %v2022 = vrot.slane %v2014, %v2021
    %v2023 = vlaneseq
    %v2024 = vshrl.u32 %v2023, 7
    %v2025 = vsub.s32 2, %v2024
    %v2026 = vrot.slane %v2014, %v2025
    %v2027 = vlaneseq
    %v2028 = vshrl.u32 %v2027, 7
    %v2029 = vsub.s32 3, %v2028
    %v2030 = vrot.slane %v2014, %v2029
    %vm2031 = vcmp.eq.s32.totalorder %v2018, 1
    %vm2032 = vcmp.eq.s32.totalorder %v2022, 1
    %vm2033 = vcmp.eq.s32.totalorder %v2026, 1
    %vm2034 = vcmp.eq.s32.totalorder %v2030, 1
    %v2035 = vsel %vm2031, %v603, %v1285
    %v2036 = vsel %vm2032, %v605, %v1389
    %v2037 = vsel %vm2033, %v1169, %v1493
    %v2038 = vsel %vm2034, %v1171, %v1597
    %v2039 = vsel %vm2031, %v610, %v1701
    %v2040 = vsel %vm2032, %v612, %v1805
    %v2041 = vsel %vm2033, %v1176, %v1909
    %v2042 = vsel %vm2034, %v1178, %v2013
    %v2051 = vcombine.low %v2035, %v2036
    %v2052 = vcombine.high %v2035, %v2036
    %v2053 = vcombine.low %v2037, %v2038
    %v2054 = vcombine.high %v2037, %v2038
    %v2056 = vunpack.c.l.s4 1966171168
    %v2057 = vunpack.c.0.s8 %v2056
    %v2058 = vlaneseq
    %v2059 = vshrl.u32 %v2058, 7
    %v2060 = vsub.s32 %v2057, %v2059
    %v2061 = vrot.slane %v2051, %v2060
    %v2063 = vunpack.c.l.s4 1966171168
    %v2064 = vunpack.c.0.s8 %v2063
    %v2065 = vlaneseq
    %v2066 = vshrl.u32 %v2065, 7
    %v2067 = vsub.s32 %v2064, %v2066
    %v2068 = vrot.slane %v2052, %v2067
    %v2070 = vunpack.c.l.s4 1966171168
    %v2071 = vunpack.c.0.s8 %v2070
    %v2072 = vlaneseq
    %v2073 = vshrl.u32 %v2072, 7
    %v2074 = vsub.s32 %v2071, %v2073
    %v2075 = vrot.slane %v2053, %v2074
    %v2077 = vunpack.c.l.s4 1966171168
    %v2078 = vunpack.c.0.s8 %v2077
    %v2079 = vlaneseq
    %v2080 = vshrl.u32 %v2079, 7
    %v2081 = vsub.s32 %v2078, %v2080
    %v2082 = vrot.slane %v2054, %v2081
    %v2083 = vcombine.low %v2061, %v2075
    %v2084 = vcombine.high %v2061, %v2075
    %v2085 = vcombine.low %v2068, %v2082
    %v2086 = vcombine.high %v2068, %v2082
    %v2088 = vunpack.c.l.s4 1966171168
    %v2089 = vunpack.c.0.s8 %v2088
    %v2090 = vlaneseq
    %v2091 = vshrl.u32 %v2090, 7
    %v2092 = vsub.s32 %v2089, %v2091
    %v2093 = vrot.slane %v2083, %v2092
    %v2095 = vunpack.c.l.s4 1966171168
    %v2096 = vunpack.c.0.s8 %v2095
    %v2097 = vlaneseq
    %v2098 = vshrl.u32 %v2097, 7
    %v2099 = vsub.s32 %v2096, %v2098
    %v2100 = vrot.slane %v2085, %v2099
    %v2102 = vunpack.c.l.s4 1966171168
    %v2103 = vunpack.c.0.s8 %v2102
    %v2104 = vlaneseq
    %v2105 = vshrl.u32 %v2104, 7
    %v2106 = vsub.s32 %v2103, %v2105
    %v2107 = vrot.slane %v2084, %v2106
    %v2109 = vunpack.c.l.s4 1966171168
    %v2110 = vunpack.c.0.s8 %v2109
    %v2111 = vlaneseq
    %v2112 = vshrl.u32 %v2111, 7
    %v2113 = vsub.s32 %v2110, %v2112
    %v2114 = vrot.slane %v2086, %v2113
    %v2115 = vcombine.high %v2093, %v2093
    %v2116 = vcombine.high %v2100, %v2100
    %v2117 = vcombine.high %v2107, %v2107
    %v2118 = vcombine.high %v2114, %v2114
    %v2119 = vcombine.low %v2039, %v2040
    %v2120 = vcombine.high %v2039, %v2040
    %v2121 = vcombine.low %v2041, %v2042
    %v2122 = vcombine.high %v2041, %v2042
    %v2124 = vunpack.c.l.s4 1966171168
    %v2125 = vunpack.c.0.s8 %v2124
    %v2126 = vlaneseq
    %v2127 = vshrl.u32 %v2126, 7
    %v2128 = vsub.s32 %v2125, %v2127
    %v2129 = vrot.slane %v2119, %v2128
    %v2131 = vunpack.c.l.s4 1966171168
    %v2132 = vunpack.c.0.s8 %v2131
    %v2133 = vlaneseq
    %v2134 = vshrl.u32 %v2133, 7
    %v2135 = vsub.s32 %v2132, %v2134
    %v2136 = vrot.slane %v2120, %v2135
    %v2138 = vunpack.c.l.s4 1966171168
    %v2139 = vunpack.c.0.s8 %v2138
    %v2140 = vlaneseq
    %v2141 = vshrl.u32 %v2140, 7
    %v2142 = vsub.s32 %v2139, %v2141
    %v2143 = vrot.slane %v2121, %v2142
    %v2145 = vunpack.c.l.s4 1966171168
    %v2146 = vunpack.c.0.s8 %v2145
    %v2147 = vlaneseq
    %v2148 = vshrl.u32 %v2147, 7
    %v2149 = vsub.s32 %v2146, %v2148
    %v2150 = vrot.slane %v2122, %v2149
    %v2151 = vcombine.low %v2129, %v2143
    %v2152 = vcombine.high %v2129, %v2143
    %v2153 = vcombine.low %v2136, %v2150
    %v2154 = vcombine.high %v2136, %v2150
    %v2156 = vunpack.c.l.s4 1966171168
    %v2157 = vunpack.c.0.s8 %v2156
    %v2158 = vlaneseq
    %v2159 = vshrl.u32 %v2158, 7
    %v2160 = vsub.s32 %v2157, %v2159
    %v2161 = vrot.slane %v2151, %v2160
    %v2163 = vunpack.c.l.s4 1966171168
    %v2164 = vunpack.c.0.s8 %v2163
    %v2165 = vlaneseq
    %v2166 = vshrl.u32 %v2165, 7
    %v2167 = vsub.s32 %v2164, %v2166
    %v2168 = vrot.slane %v2153, %v2167
    %v2170 = vunpack.c.l.s4 1966171168
    %v2171 = vunpack.c.0.s8 %v2170
    %v2172 = vlaneseq
    %v2173 = vshrl.u32 %v2172, 7
    %v2174 = vsub.s32 %v2171, %v2173
    %v2175 = vrot.slane %v2152, %v2174
    %v2177 = vunpack.c.l.s4 1966171168
    %v2178 = vunpack.c.0.s8 %v2177
    %v2179 = vlaneseq
    %v2180 = vshrl.u32 %v2179, 7
    %v2181 = vsub.s32 %v2178, %v2180
    %v2182 = vrot.slane %v2154, %v2181
    %v2183 = vcombine.high %v2161, %v2161
    %v2184 = vcombine.high %v2168, %v2168
    %v2185 = vcombine.high %v2175, %v2175
    %v2186 = vcombine.high %v2182, %v2182
    %v2203 = vlaneseq
    %vm2204 = vcmp.ge.s32.totalorder %v2203, 0
    %vm2205 = vcmp.lt.s32.totalorder %v2203, 512
    %vm2206 = vmand %vm2204, %vm2205
    %2207 = vst.msk [vmem:[#allocation2] sm:$0xf] %vm2206, %v2093
    %2208 = vst.msk [vmem:[#allocation2 + $0x4] sm:$0xf] %vm2206, %v2107
    %2209 = vst.msk [vmem:[#allocation2 + $0x8] sm:$0xf] %vm2206, %v2115
    %2210 = vst.msk [vmem:[#allocation2 + $0xc] sm:$0xf] %vm2206, %v2117
    %2211 = vst.msk [vmem:[#allocation2 + $0x10] sm:$0xf] %vm2206, %v2100
    %2212 = vst.msk [vmem:[#allocation2 + $0x14] sm:$0xf] %vm2206, %v2114
    %2213 = vst.msk [vmem:[#allocation2 + $0x18] sm:$0xf] %vm2206, %v2116
    %2214 = vst.msk [vmem:[#allocation2 + $0x1c] sm:$0xf] %vm2206, %v2118
    %2215 = vst.msk [vmem:[#allocation2 + $0x20] sm:$0xf] %vm2206, %v2161
    %2216 = vst.msk [vmem:[#allocation2 + $0x24] sm:$0xf] %vm2206, %v2175
    %2217 = vst.msk [vmem:[#allocation2 + $0x28] sm:$0xf] %vm2206, %v2183
    %2218 = vst.msk [vmem:[#allocation2 + $0x2c] sm:$0xf] %vm2206, %v2185
    %2219 = vst.msk [vmem:[#allocation2 + $0x30] sm:$0xf] %vm2206, %v2168
    %2220 = vst.msk [vmem:[#allocation2 + $0x34] sm:$0xf] %vm2206, %v2182
    %2221 = vst.msk [vmem:[#allocation2 + $0x38] sm:$0xf] %vm2206, %v2184
    %2222 = vst.msk [vmem:[#allocation2 + $0x3c] sm:$0xf] %vm2206, %v2186
    // Predicated region
    $region14: #{time2vec.1} parent=1 // pred_check
      _
    $region15: #{time2vec.1} parent=1 // pred_check_branch
      %2224 = sbr.rel (0) target = $region17
    $region16: #{time2vec.1} parent=1 // pred_region
      // Predicated region
      $region18: #{time2vec.1} parent=16 // pred_check
        _
      $region19: #{time2vec.1} parent=16 // pred_check_branch
        %2226 = sbr.rel (0) target = $region21
      $region20: #{time2vec.1} parent=16 // pred_region
        // Predicated region
        $region22: #{time2vec.1} parent=20 // pred_check
          _
        $region23: #{time2vec.1} parent=20 // pred_check_branch
          %2228 = sbr.rel target = $region25
        $region24: #{time2vec.1} parent=20 // pred_region
          // Predicated region
          $region37: #{time2vec.1} parent=24 // pred_check
            _
          $region38: #{time2vec.1} parent=24 // pred_check_branch
            %2243 = sbr.rel (0) target = $region40
          $region39: #{time2vec.1} parent=24 // pred_region
            loop: start=0, step=1, limit=1
            $region41: #{time2vec.1} parent=39 // loop_pre_header
              _
            $region42: #{time2vec.1} parent=39 // loop_header
              %s2246 = sphi 0, %s2250
              %p2247 = scmp.ge.s32.totalorder %s2246, 1
              %s2251 = sphi [#allocation2], [#allocation2]
              %s2252 = sphi %s3, %s3
            $region43: #{time2vec.1} parent=39 // loop_header_branch
              %2249 = sbr.rel (%p2247) target = $region47
            $region44: #{time2vec.1} parent=39 // loop_body
              %v2253 = vld [vmem:[%s2251] sm:$0xf]
              %2254 = vst [vmem:[%s2252] sm:$0xf] %v2253
            $region45: #{time2vec.1} parent=39 // loop_footer
              %s2250 = sadd.s32 1, %s2246
            $region46: #{time2vec.1} parent=39 // loop_footer_branch
              %2245 = sbr.rel target = $region42
            $region47: #{time2vec.1} parent=39 // loop_exit
              _
          $region40: #{time2vec.1} parent=24 // pred_fallthru
            _
        $region25: #{time2vec.1} parent=20 // pred_fallthru
          _
        // Predicated region
        $region26: #{time2vec.1} parent=20 // pred_check
          _
        $region27: #{time2vec.1} parent=20 // pred_check_branch
          %2230 = sbr.rel (0) target = $region29
        $region28: #{time2vec.1} parent=20 // pred_region
          loop: start=0, step=1, limit=1
          $region30: #{time2vec.1} parent=28 // loop_pre_header
            _
          $region31: #{time2vec.1} parent=28 // loop_header
            %s2233 = sphi 0, %s2237
            %p2234 = scmp.ge.s32.totalorder %s2233, 1
            %s2238 = sphi [#allocation2], [#allocation2]
            %s2239 = sphi %s3, %s3
          $region32: #{time2vec.1} parent=28 // loop_header_branch
            %2236 = sbr.rel (%p2234) target = $region36
          $region33: #{time2vec.1} parent=28 // loop_body
            %v2240 = vld [vmem:[%s2238] sm:$0xf]
            %2241 = vst [vmem:[%s2239] sm:$0xf] %v2240
          $region34: #{time2vec.1} parent=28 // loop_footer
            %s2237 = sadd.s32 1, %s2233
          $region35: #{time2vec.1} parent=28 // loop_footer_branch
            %2232 = sbr.rel target = $region31
          $region36: #{time2vec.1} parent=28 // loop_exit
            _
        $region29: #{time2vec.1} parent=20 // pred_fallthru
          _
      $region21: #{time2vec.1} parent=16 // pred_fallthru
        _
      %2255 = vnop
    $region17: #{time2vec.1} parent=1 // pred_fallthru
      _
    // Predicated region
    $region48: #{time2vec.1} parent=1 // pred_check
      _
    $region49: #{time2vec.1} parent=1 // pred_check_branch
      %2257 = sbr.rel (0) target = $region51
    $region50: #{time2vec.1} parent=1 // pred_region
      _
    $region51: #{time2vec.1} parent=1 // pred_fallthru
      _

</llo_original>
